<compile_context>
chip_gen: v6e
topology: v6e:2x2x1
jax: 0.10.0
libtpu: 0.0.40
codegen_flags: <defaults>
</compile_context>

<pallas_src>
import functools

import numpy as np

import jax
import jax.numpy as jnp
from jax.experimental import pallas as pl
from jax.experimental.pallas import tpu as pltpu


def _round_up(x, m):
    return ((x + m - 1) // m) * m


def _split_bf16(x):
    """Split f32 x into a bf16-exact high part and the exact residual."""
    hi = x.astype(jnp.bfloat16).astype(jnp.float32)
    return hi, x - hi


def _recon_loss_kernel(recon_cat_ref, recon_con_ref, y_ref, mask_ref,
                       onehot_ref, onehot_t_ref,
                       loss_ref, labels_ref,
                       acc_cat_num, acc_cat_den, acc_con_num, acc_con_den,
                       *, cat_lengths, batch):
    C = len(cat_lengths)
    step = pl.program_id(0)

    # ---- init tiny accumulators on the first tile ----------------------------
    @pl.when(step == 0)
    def _init():
        acc_cat_num[...] = jnp.zeros_like(acc_cat_num)
        acc_cat_den[...] = jnp.zeros_like(acc_cat_den)
        acc_con_num[...] = jnp.zeros_like(acc_con_num)
        acc_con_den[...] = jnp.zeros_like(acc_con_den)

    # ---- load the tile once (inputs may be bf16; cast in-kernel) -------------
    logits = recon_cat_ref[...].astype(jnp.float32)            # (TB, S)
    TB, S = logits.shape

    yb = y_ref[...].astype(jnp.float32)                        # (TB, C+NC)
    mk = mask_ref[...].astype(jnp.float32)                     # (TB, C+NC)
    # torch `.long()` truncation of the float-stored class indices.
    tgt_f = yb[:, :C].astype(jnp.int32).astype(jnp.float32)    # (TB, C)
    tgt_con = yb[:, C:]                                        # (TB, NC)
    mcat = mk[:, :C]
    mcon = mk[:, C:]

    onehot = onehot_ref[...]                                   # (S, C) 0/1 f32, resident
    onehot_t = onehot_t_ref[...]                               # (C, S) 0/1 f32, resident

    # Row-validity for the (possibly partial) last tile: OOB rows hold garbage.
    rows = step * TB + jax.lax.broadcasted_iota(jnp.int32, (TB, 1), 0)
    valid = rows < batch                                       # (TB, 1) bool

    col_i = jax.lax.broadcasted_iota(jnp.int32, (1, S), 1)
    col_f = col_i.astype(jnp.float32)
    cat_col = jax.lax.broadcasted_iota(jnp.int32, (1, C), 1)
    NEG = jnp.float32(-1e30)
    BIG = jnp.int32(2 ** 30)

    # ---- pass 1: per-field max + first-occurrence argmax (2 XLU reduces/field)
    m_per = jnp.zeros((TB, C), jnp.float32)
    labels = jnp.zeros((TB, C), jnp.int32)
    offs_row = jnp.zeros((1, C), jnp.float32)
    off = 0
    for i, L in enumerate(cat_lengths):
        sel = cat_col == i                                     # (1, C)
        fm = jnp.logical_and(col_i >= off, col_i < off + L)    # (1, S)
        masked = jnp.where(fm, logits, NEG)                    # (TB, S)
        m_i = jnp.max(masked, axis=1, keepdims=True)           # (TB, 1)
        hit = jnp.logical_and(masked == m_i, fm)
        idx = jnp.min(jnp.where(hit, col_i, BIG),
                      axis=1, keepdims=True) - off             # first occurrence
        m_per = jnp.where(sel, m_i, m_per)
        labels = jnp.where(sel, idx, labels)
        offs_row = jnp.where(sel, jnp.float32(off), offs_row)
        off += L
    labels_ref[...] = labels                                   # single dense store

    # ---- per-field scalars -> lane space on the MXU ---------------------------
    # The same shift m~ is used for sum-exp and the picked logit, so the CE is
    # exact regardless of the broadcast's precision.
    m_exp = jnp.dot(m_per, onehot_t, preferred_element_type=jnp.float32)

    # Target-column broadcast, exact under any matmul operand precision: split
    # the integer column id into <256 "bytes" (each exactly representable).
    toff = tgt_f + offs_row                                    # (TB, C) integer-valued
    thi = jnp.floor(toff * (1.0 / 256.0))
    tlo = toff - thi * 256.0
    t_col = (jnp.dot(thi, onehot_t, preferred_element_type=jnp.float32) * 256.0
             + jnp.dot(tlo, onehot_t, preferred_element_type=jnp.float32))
    tmask = col_f == t_col                                     # (TB, S)

    # ---- one EUP pass + segmented lane sums on the MXU ------------------------
    shifted = logits - m_exp
    e = jnp.exp(shifted)
    picked_sel = jnp.where(tmask, shifted, 0.0)

    e_hi, e_lo = _split_bf16(e)
    p_hi, p_lo = _split_bf16(picked_sel)
    sumexp = (jnp.dot(e_hi, onehot, preferred_element_type=jnp.float32)
              + jnp.dot(e_lo, onehot, preferred_element_type=jnp.float32))   # (TB, C)
    picked = (jnp.dot(p_hi, onehot, preferred_element_type=jnp.float32)
              + jnp.dot(p_lo, onehot, preferred_element_type=jnp.float32))   # (TB, C)
    # ce_i = log(sum_field exp(x - m~)) - (x_t - m~) = logsumexp(x) - x_t
    ce = jnp.log(sumexp) - picked                              # (TB, C)

    # ---- per-tile partial sums (invalid rows gated with selects) --------------
    acc_cat_num[...] += jnp.sum(jnp.where(valid, ce * mcat, 0.0),
                                axis=0, keepdims=True)
    acc_cat_den[...] += jnp.sum(jnp.where(valid, mcat, 0.0),
                                axis=0, keepdims=True)

    diff = recon_con_ref[...].astype(jnp.float32) - tgt_con
    acc_con_num[...] += jnp.sum(jnp.where(valid, diff * diff * mcon, 0.0),
                                axis=0, keepdims=True)
    acc_con_den[...] += jnp.sum(jnp.where(valid, mcon, 0.0),
                                axis=0, keepdims=True)

    # ---- finalize on the last tile ---------------------------------------------
    @pl.when(step == pl.num_programs(0) - 1)
    def _finalize():
        loss_cat = jnp.sum(acc_cat_num[...] /
                           (acc_cat_den[...] + 1e-8)) / jnp.float32(C)
        loss_con = (jnp.sum(acc_con_num[...]) /
                    (jnp.sum(acc_con_den[...]) + 1e-8))
        loss_ref[0, 0] = (loss_cat + loss_con) * jnp.float32(0.5)


class ReconstructionLossMLP:
    """JAX/Pallas port of ReconstructionLoss_MLP.forward."""

    def __init__(self, num_cat, num_con, cat_lengths, tile_batch=1024):
        assert len(cat_lengths) == num_cat
        self.num_cat = int(num_cat)
        self.num_con = int(num_con)
        self.cat_lengths = tuple(int(x) for x in cat_lengths)
        self.total_cat = int(sum(self.cat_lengths))
        self.tile_batch = max(8, _round_up(int(tile_batch), 8))

        # Resident segment one-hot matrices: lane s of recon_cat belongs to
        # field field_id[s].  f32 keeps the 0/1 values exact on the MXU.
        field_id = np.repeat(np.arange(self.num_cat),
                             np.asarray(self.cat_lengths))
        oh = (field_id[:, None] == np.arange(self.num_cat)[None, :])
        self._onehot = jnp.asarray(oh.astype(np.float32))        # (S, C)
        self._onehot_t = jnp.asarray(oh.T.astype(np.float32))    # (C, S)

        # Generation-aware VMEM budget (v7x: 64 MiB physical, v5e/v6e: 128 MiB).
        try:
            cap = int(pltpu.get_tpu_info().vmem_capacity_bytes)
        except Exception:
            cap = 64 * 1024 * 1024
        self._tile_vmem_budget = min(3 * cap // 8, 40 * 1024 * 1024)
        self._vmem_limit = int(min(max(cap // 2, 32 * 1024 * 1024),
                                   100 * 1024 * 1024))

    def _pick_tile(self, B, itemsizes):
        S, C, NC = self.total_cat, self.num_cat, self.num_con
        it_cat, it_con, it_y, it_mask = itemsizes
        # Double-buffered streamed input rows + live f32 (TB, S) temporaries.
        per_row = (2 * (S * it_cat + NC * it_con + (C + NC) * (it_y + it_mask))
                   + 12 * S * 4 + 8 * (C + NC) * 4)
        tb = self._tile_vmem_budget // max(per_row, 1)
        tb = min(self.tile_batch, tb, _round_up(B, 8))
        return max(8, (tb // 8) * 8)

    def __call__(self, results, y, mask):
        recon_con, recon_cat = results
        B = y.shape[0]
        C, NC, S = self.num_cat, self.num_con, self.total_cat
        assert recon_cat.shape == (B, S) and recon_con.shape == (B, NC)
        assert y.shape == (B, C + NC) and mask.shape == (B, C + NC)

        TB = self._pick_tile(B, (recon_cat.dtype.itemsize,
                                 recon_con.dtype.itemsize,
                                 y.dtype.itemsize,
                                 mask.dtype.itemsize))
        grid = (pl.cdiv(B, TB),)   # no padding: partial last tile masked in-kernel

        kernel = functools.partial(_recon_loss_kernel,
                                   cat_lengths=self.cat_lengths, batch=B)

        grid_spec = pltpu.PrefetchScalarGridSpec(
            num_scalar_prefetch=0,
            grid=grid,
            in_specs=[
                pl.BlockSpec((TB, S), lambda b: (b, 0)),        # recon_cat (orig dtype)
                pl.BlockSpec((TB, NC), lambda b: (b, 0)),       # recon_con (orig dtype)
                pl.BlockSpec((TB, C + NC), lambda b: (b, 0)),   # y, unsliced
                pl.BlockSpec((TB, C + NC), lambda b: (b, 0)),   # mask, unsliced
                pl.BlockSpec((S, C), lambda b: (0, 0)),         # seg one-hot (resident)
                pl.BlockSpec((C, S), lambda b: (0, 0)),         # seg one-hot^T (resident)
            ],
            out_specs=(
                pl.BlockSpec(memory_space=pltpu.MemorySpace.SMEM),  # scalar loss
                pl.BlockSpec((TB, C), lambda b: (b, 0)),            # labels
            ),
            scratch_shapes=[
                pltpu.VMEM((1, C), jnp.float32),    # sum(ce * mask) per field
                pltpu.VMEM((1, C), jnp.float32),    # sum(mask) per field
                pltpu.VMEM((1, NC), jnp.float32),   # sum(diff^2 * mask)
                pltpu.VMEM((1, NC), jnp.float32),   # sum(mask) continuous
            ],
        )

        loss, labels = pl.pallas_call(
            kernel,
            out_shape=(jax.ShapeDtypeStruct((1, 1), jnp.float32),
                       jax.ShapeDtypeStruct((B, C), jnp.int32)),
            grid_spec=grid_spec,
            compiler_params=pltpu.CompilerParams(
                # batch axis carries the loss accumulators -> arbitrary.
                dimension_semantics=("arbitrary",),
                vmem_limit_bytes=self._vmem_limit,
            ),
        )(recon_cat, recon_con, y, mask, self._onehot, self._onehot_t)

        cat_labels = [labels[:, i] for i in range(C)]
        return loss[0, 0], cat_labels, recon_con


def _reference(results, y, mask, num_cat, cat_lengths):
    """Pure-JAX reference mirroring the PyTorch forward, for verification."""
    recon_con, recon_cat = results
    target_cat = y[:, :num_cat].astype(jnp.int32)
    target_con = y[:, num_cat:]
    mask_cat = mask[:, :num_cat]
    mask_con = mask[:, num_cat:]

    loss_cat = 0.0
    labels = []
    off = 0
    for i, L in enumerate(cat_lengths):
        logits = recon_cat[:, off:off + L]
        tgt = target_cat[:, i]
        lse = jax.nn.logsumexp(logits, axis=1)
        picked = jnp.take_along_axis(logits, tgt[:, None], axis=1)[:, 0]
        ce = lse - picked
        mi = mask_cat[:, i]
        loss_cat += (ce * mi).sum() / (mi.sum() + 1e-8)
        labels.append(jnp.argmax(logits, axis=1).astype(jnp.int32))
        off += L
    loss_cat = loss_cat / num_cat
    lc = (recon_con - target_con) ** 2
    loss_con = (lc * mask_con).sum() / (mask_con.sum() + 1e-8)
    return (loss_cat + loss_con) / 2, labels


if __name__ == "__main__":
    def make_inputs(key, B, cat_lengths, num_con):
        num_cat = len(cat_lengths)
        S = sum(cat_lengths)
        k1, k2, k3, k4, k5 = jax.random.split(key, 5)
        recon_cat = jax.random.normal(k1, (B, S), dtype=jnp.float32)
        recon_con = jax.random.normal(k2, (B, num_con), dtype=jnp.float32)
        cat_targets = jnp.stack(
            [jax.random.randint(jax.random.fold_in(k3, i), (B,), 0, L)
             for i, L in enumerate(cat_lengths)], axis=1).astype(jnp.float32)
        con_targets = jax.random.normal(k4, (B, num_con), dtype=jnp.float32)
        y = jnp.concatenate([cat_targets, con_targets], axis=1)
        mask = jax.random.bernoulli(
            k5, 0.75, (B, num_cat + num_con)).astype(jnp.float32)
        return (recon_con, recon_cat), y, mask

    cat_lengths = [3, 5, 4, 6]       # per-field number of categories
    num_cat, num_con = len(cat_lengths), 4

    # --- Test 1: single tile, B not a multiple of 8 (partial-block path) ------
    results, y, mask = make_inputs(jax.random.PRNGKey(0), 13, cat_lengths,
                                   num_con)
    mod = ReconstructionLossMLP(num_cat, num_con, cat_lengths)
    loss, cat_labels, recon_con_out = mod(results, y, mask)
    jax.block_until_ready(loss)
    jax.block_until_ready(cat_labels)

    ref_loss, ref_labels = _reference(results, y, mask, num_cat, cat_lengths)
    assert jnp.allclose(loss, ref_loss, rtol=1e-4, atol=1e-5), (loss, ref_loss)
    for a, b in zip(cat_labels, ref_labels):
        assert jnp.array_equal(a, b)
    assert jnp.array_equal(recon_con_out, results[0])

    # --- Test 2: multi-tile grid with a partial last tile (B=20, tile=8) ------
    results2, y2, mask2 = make_inputs(jax.random.PRNGKey(1), 20, cat_lengths,
                                      num_con)
    mod2 = ReconstructionLossMLP(num_cat, num_con, cat_lengths, tile_batch=8)
    loss2, labels2, _ = mod2(results2, y2, mask2)
    jax.block_until_ready(loss2)
    ref_loss2, ref_labels2 = _reference(results2, y2, mask2, num_cat,
                                        cat_lengths)
    assert jnp.allclose(loss2, ref_loss2, rtol=1e-4, atol=1e-5), (loss2,
                                                                  ref_loss2)
    for a, b in zip(labels2, ref_labels2):
        assert jnp.array_equal(a, b)

    print("KERNEL_OK")
</pallas_src>

<mosaic_0001>
module attributes {stable_mosaic.version = 11 : i64} {
  func.func @_recon_loss_kernel(%arg0: i32, %arg1: memref<16x18xf32, #tpu.memory_space<vmem>>, %arg2: memref<16x4xf32, #tpu.memory_space<vmem>>, %arg3: memref<16x8xf32, #tpu.memory_space<vmem>>, %arg4: memref<16x8xf32, #tpu.memory_space<vmem>>, %arg5: memref<18x4xf32, #tpu.memory_space<vmem>>, %arg6: memref<4x18xf32, #tpu.memory_space<vmem>>, %arg7: memref<1x1xf32, #tpu.memory_space<smem>>, %arg8: memref<16x4xi32, #tpu.memory_space<vmem>>, %arg9: memref<1x4xf32, #tpu.memory_space<vmem>>, %arg10: memref<1x4xf32, #tpu.memory_space<vmem>>, %arg11: memref<1x4xf32, #tpu.memory_space<vmem>>, %arg12: memref<1x4xf32, #tpu.memory_space<vmem>>) attributes {dimension_semantics = [#tpu.dimension_semantics<arbitrary>], iteration_bounds = array<i64: 1>, scalar_prefetch = 0 : i64, scratch_operands = 4 : i64, tpu.core_type = #tpu.core_type<tc>, window_params = [{transform_indices = @transform_0, window_bounds = array<i64: 16, 18>}, {transform_indices = @transform_1, window_bounds = array<i64: 16, 4>}, {transform_indices = @transform_2, window_bounds = array<i64: 16, 8>}, {transform_indices = @transform_3, window_bounds = array<i64: 16, 8>}, {pipeline_mode = #tpu.pipeline_mode<synchronous>, transform_indices = @transform_4, window_bounds = array<i64: 18, 4>}, {pipeline_mode = #tpu.pipeline_mode<synchronous>, transform_indices = @transform_5, window_bounds = array<i64: 4, 18>}, {transform_indices = @transform_6, window_bounds = array<i64: 1, 1>}, {transform_indices = @transform_7, window_bounds = array<i64: 16, 4>}]} {
    %c0_i32 = arith.constant 0 : i32
    %0 = arith.cmpi eq, %arg0, %c0_i32 : i32
    %1 = arith.extui %0 : i1 to i32
    %c0_i32_0 = arith.constant 0 : i32
    %2 = arith.cmpi ne, %1, %c0_i32_0 : i32
    scf.if %2 {
      %cst_82 = arith.constant 0.000000e+00 : f32
      %253 = vector.broadcast %cst_82 : f32 to vector<1x4xf32>
      %c0_83 = arith.constant 0 : index
      %c0_84 = arith.constant 0 : index
      %254 = vector.load %arg9[%c0_83, %c0_84] : memref<1x4xf32, #tpu.memory_space<vmem>>, vector<1x4xf32>
      tpu.vector_store %arg9[%c0_83, %c0_84], %253 {strides = array<i32>} : memref<1x4xf32, #tpu.memory_space<vmem>>, vector<1x4xf32>,
      %cst_85 = arith.constant 0.000000e+00 : f32
      %255 = vector.broadcast %cst_85 : f32 to vector<1x4xf32>
      %c0_86 = arith.constant 0 : index
      %c0_87 = arith.constant 0 : index
      %256 = vector.load %arg10[%c0_86, %c0_87] : memref<1x4xf32, #tpu.memory_space<vmem>>, vector<1x4xf32>
      tpu.vector_store %arg10[%c0_86, %c0_87], %255 {strides = array<i32>} : memref<1x4xf32, #tpu.memory_space<vmem>>, vector<1x4xf32>,
      %cst_88 = arith.constant 0.000000e+00 : f32
      %257 = vector.broadcast %cst_88 : f32 to vector<1x4xf32>
      %c0_89 = arith.constant 0 : index
      %c0_90 = arith.constant 0 : index
      %258 = vector.load %arg11[%c0_89, %c0_90] : memref<1x4xf32, #tpu.memory_space<vmem>>, vector<1x4xf32>
      tpu.vector_store %arg11[%c0_89, %c0_90], %257 {strides = array<i32>} : memref<1x4xf32, #tpu.memory_space<vmem>>, vector<1x4xf32>,
      %cst_91 = arith.constant 0.000000e+00 : f32
      %259 = vector.broadcast %cst_91 : f32 to vector<1x4xf32>
      %c0_92 = arith.constant 0 : index
      %c0_93 = arith.constant 0 : index
      %260 = vector.load %arg12[%c0_92, %c0_93] : memref<1x4xf32, #tpu.memory_space<vmem>>, vector<1x4xf32>
      tpu.vector_store %arg12[%c0_92, %c0_93], %259 {strides = array<i32>} : memref<1x4xf32, #tpu.memory_space<vmem>>, vector<1x4xf32>,
    } else {
    }
    %c0 = arith.constant 0 : index
    %c0_1 = arith.constant 0 : index
    %3 = vector.load %arg1[%c0, %c0_1] : memref<16x18xf32, #tpu.memory_space<vmem>>, vector<16x18xf32>
    %c0_2 = arith.constant 0 : index
    %c0_3 = arith.constant 0 : index
    %4 = vector.load %arg3[%c0_2, %c0_3] : memref<16x8xf32, #tpu.memory_space<vmem>>, vector<16x8xf32>
    %c0_4 = arith.constant 0 : index
    %c0_5 = arith.constant 0 : index
    %5 = vector.load %arg4[%c0_4, %c0_5] : memref<16x8xf32, #tpu.memory_space<vmem>>, vector<16x8xf32>
    %6 = vector.extract_strided_slice %4 {offsets = [0, 0], sizes = [16, 4], strides = [1, 1]} : vector<16x8xf32> to vector<16x4xf32>
    %7 = arith.fptosi %6 : vector<16x4xf32> to vector<16x4xi32>
    %8 = arith.sitofp %7 : vector<16x4xi32> to vector<16x4xf32>
    %9 = vector.extract_strided_slice %4 {offsets = [0, 4], sizes = [16, 4], strides = [1, 1]} : vector<16x8xf32> to vector<16x4xf32>
    %10 = vector.extract_strided_slice %5 {offsets = [0, 0], sizes = [16, 4], strides = [1, 1]} : vector<16x8xf32> to vector<16x4xf32>
    %11 = vector.extract_strided_slice %5 {offsets = [0, 4], sizes = [16, 4], strides = [1, 1]} : vector<16x8xf32> to vector<16x4xf32>
    %c0_6 = arith.constant 0 : index
    %c0_7 = arith.constant 0 : index
    %12 = vector.load %arg5[%c0_6, %c0_7] : memref<18x4xf32, #tpu.memory_space<vmem>>, vector<18x4xf32>
    %c0_8 = arith.constant 0 : index
    %c0_9 = arith.constant 0 : index
    %13 = vector.load %arg6[%c0_8, %c0_9] : memref<4x18xf32, #tpu.memory_space<vmem>>, vector<4x18xf32>
    %c16_i32 = arith.constant 16 : i32
    %14 = arith.muli %arg0, %c16_i32 : i32
    %15 = tpu.iota {dimensions = array<i32: 0>} : vector<16x1xi32>
    %16 = vector.broadcast %14 : i32 to vector<16x1xi32>
    %17 = arith.addi %16, %15 : vector<16x1xi32>
    %c13_i32 = arith.constant 13 : i32
    %18 = vector.broadcast %c13_i32 : i32 to vector<16x1xi32>
    %19 = arith.cmpi slt, %17, %18 : vector<16x1xi32>
    %20 = tpu.iota {dimensions = array<i32: 1>} : vector<1x18xi32>
    %21 = arith.sitofp %20 : vector<1x18xi32> to vector<1x18xf32>
    %22 = tpu.iota {dimensions = array<i32: 1>} : vector<1x4xi32>
    %cst = arith.constant 0.000000e+00 : f32
    %23 = vector.broadcast %cst : f32 to vector<16x4xf32>
    %c0_i32_10 = arith.constant 0 : i32
    %24 = vector.broadcast %c0_i32_10 : i32 to vector<16x4xi32>
    %cst_11 = arith.constant 0.000000e+00 : f32
    %25 = vector.broadcast %cst_11 : f32 to vector<1x4xf32>
    %c0_i32_12 = arith.constant 0 : i32
    %26 = vector.broadcast %c0_i32_12 : i32 to vector<1x4xi32>
    %27 = arith.cmpi eq, %22, %26 : vector<1x4xi32>
    %c0_i32_13 = arith.constant 0 : i32
    %28 = vector.broadcast %c0_i32_13 : i32 to vector<1x18xi32>
    %29 = arith.cmpi sge, %20, %28 : vector<1x18xi32>
    %c3_i32 = arith.constant 3 : i32
    %30 = vector.broadcast %c3_i32 : i32 to vector<1x18xi32>
    %31 = arith.cmpi slt, %20, %30 : vector<1x18xi32>
    %32 = arith.andi %29, %31 : vector<1x18xi1>
    %cst_14 = arith.constant -1.000000e+30 : f32
    %33 = vector.shape_cast %32 : vector<1x18xi1> to vector<1x18xi1>
    %34 = vector.broadcast %33 : vector<1x18xi1> to vector<16x18xi1>
    %35 = vector.broadcast %cst_14 : f32 to vector<16x18xf32>
    %36 = arith.select %34, %3, %35 : vector<16x18xi1>, vector<16x18xf32>
    %cst_15 = arith.constant dense<0xFF800000> : vector<16xf32>
    %37 = vector.multi_reduction <maximumf>, %36, %cst_15 [1] : vector<16x18xf32> to vector<16xf32>
    %38 = vector.shape_cast %37 : vector<16xf32> to vector<16x1xf32>
    %39 = vector.broadcast %38 : vector<16x1xf32> to vector<16x18xf32>
    %40 = arith.cmpf oeq, %36, %39 : vector<16x18xf32>
    %41 = vector.broadcast %32 : vector<1x18xi1> to vector<16x18xi1>
    %42 = arith.andi %40, %41 : vector<16x18xi1>
    %c1073741824_i32 = arith.constant 1073741824 : i32
    %43 = vector.shape_cast %20 : vector<1x18xi32> to vector<1x18xi32>
    %44 = vector.broadcast %43 : vector<1x18xi32> to vector<16x18xi32>
    %45 = vector.broadcast %c1073741824_i32 : i32 to vector<16x18xi32>
    %46 = arith.select %42, %44, %45 : vector<16x18xi1>, vector<16x18xi32>
    %cst_16 = arith.constant dense<2147483647> : vector<16xi32>
    %47 = vector.multi_reduction <minsi>, %46, %cst_16 [1] : vector<16x18xi32> to vector<16xi32>
    %48 = vector.shape_cast %47 : vector<16xi32> to vector<16x1xi32>
    %c0_i32_17 = arith.constant 0 : i32
    %49 = vector.broadcast %c0_i32_17 : i32 to vector<16x1xi32>
    %50 = arith.subi %48, %49 : vector<16x1xi32>
    %51 = vector.shape_cast %27 : vector<1x4xi1> to vector<1x4xi1>
    %52 = vector.broadcast %51 : vector<1x4xi1> to vector<16x4xi1>
    %53 = vector.shape_cast %38 : vector<16x1xf32> to vector<16x1xf32>
    %54 = vector.broadcast %53 : vector<16x1xf32> to vector<16x4xf32>
    %55 = arith.select %52, %54, %23 : vector<16x4xi1>, vector<16x4xf32>
    %56 = vector.shape_cast %27 : vector<1x4xi1> to vector<1x4xi1>
    %57 = vector.broadcast %56 : vector<1x4xi1> to vector<16x4xi1>
    %58 = vector.shape_cast %50 : vector<16x1xi32> to vector<16x1xi32>
    %59 = vector.broadcast %58 : vector<16x1xi32> to vector<16x4xi32>
    %60 = arith.select %57, %59, %24 : vector<16x4xi1>, vector<16x4xi32>
    %cst_18 = arith.constant 0.000000e+00 : f32
    %61 = vector.broadcast %cst_18 : f32 to vector<1x4xf32>
    %62 = arith.select %27, %61, %25 : vector<1x4xi1>, vector<1x4xf32>
    %c1_i32 = arith.constant 1 : i32
    %63 = vector.broadcast %c1_i32 : i32 to vector<1x4xi32>
    %64 = arith.cmpi eq, %22, %63 : vector<1x4xi32>
    %c3_i32_19 = arith.constant 3 : i32
    %65 = vector.broadcast %c3_i32_19 : i32 to vector<1x18xi32>
    %66 = arith.cmpi sge, %20, %65 : vector<1x18xi32>
    %c8_i32 = arith.constant 8 : i32
    %67 = vector.broadcast %c8_i32 : i32 to vector<1x18xi32>
    %68 = arith.cmpi slt, %20, %67 : vector<1x18xi32>
    %69 = arith.andi %66, %68 : vector<1x18xi1>
    %cst_20 = arith.constant -1.000000e+30 : f32
    %70 = vector.shape_cast %69 : vector<1x18xi1> to vector<1x18xi1>
    %71 = vector.broadcast %70 : vector<1x18xi1> to vector<16x18xi1>
    %72 = vector.broadcast %cst_20 : f32 to vector<16x18xf32>
    %73 = arith.select %71, %3, %72 : vector<16x18xi1>, vector<16x18xf32>
    %cst_21 = arith.constant dense<0xFF800000> : vector<16xf32>
    %74 = vector.multi_reduction <maximumf>, %73, %cst_21 [1] : vector<16x18xf32> to vector<16xf32>
    %75 = vector.shape_cast %74 : vector<16xf32> to vector<16x1xf32>
    %76 = vector.broadcast %75 : vector<16x1xf32> to vector<16x18xf32>
    %77 = arith.cmpf oeq, %73, %76 : vector<16x18xf32>
    %78 = vector.broadcast %69 : vector<1x18xi1> to vector<16x18xi1>
    %79 = arith.andi %77, %78 : vector<16x18xi1>
    %c1073741824_i32_22 = arith.constant 1073741824 : i32
    %80 = vector.shape_cast %20 : vector<1x18xi32> to vector<1x18xi32>
    %81 = vector.broadcast %80 : vector<1x18xi32> to vector<16x18xi32>
    %82 = vector.broadcast %c1073741824_i32_22 : i32 to vector<16x18xi32>
    %83 = arith.select %79, %81, %82 : vector<16x18xi1>, vector<16x18xi32>
    %cst_23 = arith.constant dense<2147483647> : vector<16xi32>
    %84 = vector.multi_reduction <minsi>, %83, %cst_23 [1] : vector<16x18xi32> to vector<16xi32>
    %85 = vector.shape_cast %84 : vector<16xi32> to vector<16x1xi32>
    %c3_i32_24 = arith.constant 3 : i32
    %86 = vector.broadcast %c3_i32_24 : i32 to vector<16x1xi32>
    %87 = arith.subi %85, %86 : vector<16x1xi32>
    %88 = vector.shape_cast %64 : vector<1x4xi1> to vector<1x4xi1>
    %89 = vector.broadcast %88 : vector<1x4xi1> to vector<16x4xi1>
    %90 = vector.shape_cast %75 : vector<16x1xf32> to vector<16x1xf32>
    %91 = vector.broadcast %90 : vector<16x1xf32> to vector<16x4xf32>
    %92 = arith.select %89, %91, %55 : vector<16x4xi1>, vector<16x4xf32>
    %93 = vector.shape_cast %64 : vector<1x4xi1> to vector<1x4xi1>
    %94 = vector.broadcast %93 : vector<1x4xi1> to vector<16x4xi1>
    %95 = vector.shape_cast %87 : vector<16x1xi32> to vector<16x1xi32>
    %96 = vector.broadcast %95 : vector<16x1xi32> to vector<16x4xi32>
    %97 = arith.select %94, %96, %60 : vector<16x4xi1>, vector<16x4xi32>
    %cst_25 = arith.constant 3.000000e+00 : f32
    %98 = vector.broadcast %cst_25 : f32 to vector<1x4xf32>
    %99 = arith.select %64, %98, %62 : vector<1x4xi1>, vector<1x4xf32>
    %c2_i32 = arith.constant 2 : i32
    %100 = vector.broadcast %c2_i32 : i32 to vector<1x4xi32>
    %101 = arith.cmpi eq, %22, %100 : vector<1x4xi32>
    %c8_i32_26 = arith.constant 8 : i32
    %102 = vector.broadcast %c8_i32_26 : i32 to vector<1x18xi32>
    %103 = arith.cmpi sge, %20, %102 : vector<1x18xi32>
    %c12_i32 = arith.constant 12 : i32
    %104 = vector.broadcast %c12_i32 : i32 to vector<1x18xi32>
    %105 = arith.cmpi slt, %20, %104 : vector<1x18xi32>
    %106 = arith.andi %103, %105 : vector<1x18xi1>
    %cst_27 = arith.constant -1.000000e+30 : f32
    %107 = vector.shape_cast %106 : vector<1x18xi1> to vector<1x18xi1>
    %108 = vector.broadcast %107 : vector<1x18xi1> to vector<16x18xi1>
    %109 = vector.broadcast %cst_27 : f32 to vector<16x18xf32>
    %110 = arith.select %108, %3, %109 : vector<16x18xi1>, vector<16x18xf32>
    %cst_28 = arith.constant dense<0xFF800000> : vector<16xf32>
    %111 = vector.multi_reduction <maximumf>, %110, %cst_28 [1] : vector<16x18xf32> to vector<16xf32>
    %112 = vector.shape_cast %111 : vector<16xf32> to vector<16x1xf32>
    %113 = vector.broadcast %112 : vector<16x1xf32> to vector<16x18xf32>
    %114 = arith.cmpf oeq, %110, %113 : vector<16x18xf32>
    %115 = vector.broadcast %106 : vector<1x18xi1> to vector<16x18xi1>
    %116 = arith.andi %114, %115 : vector<16x18xi1>
    %c1073741824_i32_29 = arith.constant 1073741824 : i32
    %117 = vector.shape_cast %20 : vector<1x18xi32> to vector<1x18xi32>
    %118 = vector.broadcast %117 : vector<1x18xi32> to vector<16x18xi32>
    %119 = vector.broadcast %c1073741824_i32_29 : i32 to vector<16x18xi32>
    %120 = arith.select %116, %118, %119 : vector<16x18xi1>, vector<16x18xi32>
    %cst_30 = arith.constant dense<2147483647> : vector<16xi32>
    %121 = vector.multi_reduction <minsi>, %120, %cst_30 [1] : vector<16x18xi32> to vector<16xi32>
    %122 = vector.shape_cast %121 : vector<16xi32> to vector<16x1xi32>
    %c8_i32_31 = arith.constant 8 : i32
    %123 = vector.broadcast %c8_i32_31 : i32 to vector<16x1xi32>
    %124 = arith.subi %122, %123 : vector<16x1xi32>
    %125 = vector.shape_cast %101 : vector<1x4xi1> to vector<1x4xi1>
    %126 = vector.broadcast %125 : vector<1x4xi1> to vector<16x4xi1>
    %127 = vector.shape_cast %112 : vector<16x1xf32> to vector<16x1xf32>
    %128 = vector.broadcast %127 : vector<16x1xf32> to vector<16x4xf32>
    %129 = arith.select %126, %128, %92 : vector<16x4xi1>, vector<16x4xf32>
    %130 = vector.shape_cast %101 : vector<1x4xi1> to vector<1x4xi1>
    %131 = vector.broadcast %130 : vector<1x4xi1> to vector<16x4xi1>
    %132 = vector.shape_cast %124 : vector<16x1xi32> to vector<16x1xi32>
    %133 = vector.broadcast %132 : vector<16x1xi32> to vector<16x4xi32>
    %134 = arith.select %131, %133, %97 : vector<16x4xi1>, vector<16x4xi32>
    %cst_32 = arith.constant 8.000000e+00 : f32
    %135 = vector.broadcast %cst_32 : f32 to vector<1x4xf32>
    %136 = arith.select %101, %135, %99 : vector<1x4xi1>, vector<1x4xf32>
    %c3_i32_33 = arith.constant 3 : i32
    %137 = vector.broadcast %c3_i32_33 : i32 to vector<1x4xi32>
    %138 = arith.cmpi eq, %22, %137 : vector<1x4xi32>
    %c12_i32_34 = arith.constant 12 : i32
    %139 = vector.broadcast %c12_i32_34 : i32 to vector<1x18xi32>
    %140 = arith.cmpi sge, %20, %139 : vector<1x18xi32>
    %c18_i32 = arith.constant 18 : i32
    %141 = vector.broadcast %c18_i32 : i32 to vector<1x18xi32>
    %142 = arith.cmpi slt, %20, %141 : vector<1x18xi32>
    %143 = arith.andi %140, %142 : vector<1x18xi1>
    %cst_35 = arith.constant -1.000000e+30 : f32
    %144 = vector.shape_cast %143 : vector<1x18xi1> to vector<1x18xi1>
    %145 = vector.broadcast %144 : vector<1x18xi1> to vector<16x18xi1>
    %146 = vector.broadcast %cst_35 : f32 to vector<16x18xf32>
    %147 = arith.select %145, %3, %146 : vector<16x18xi1>, vector<16x18xf32>
    %cst_36 = arith.constant dense<0xFF800000> : vector<16xf32>
    %148 = vector.multi_reduction <maximumf>, %147, %cst_36 [1] : vector<16x18xf32> to vector<16xf32>
    %149 = vector.shape_cast %148 : vector<16xf32> to vector<16x1xf32>
    %150 = vector.broadcast %149 : vector<16x1xf32> to vector<16x18xf32>
    %151 = arith.cmpf oeq, %147, %150 : vector<16x18xf32>
    %152 = vector.broadcast %143 : vector<1x18xi1> to vector<16x18xi1>
    %153 = arith.andi %151, %152 : vector<16x18xi1>
    %c1073741824_i32_37 = arith.constant 1073741824 : i32
    %154 = vector.shape_cast %20 : vector<1x18xi32> to vector<1x18xi32>
    %155 = vector.broadcast %154 : vector<1x18xi32> to vector<16x18xi32>
    %156 = vector.broadcast %c1073741824_i32_37 : i32 to vector<16x18xi32>
    %157 = arith.select %153, %155, %156 : vector<16x18xi1>, vector<16x18xi32>
    %cst_38 = arith.constant dense<2147483647> : vector<16xi32>
    %158 = vector.multi_reduction <minsi>, %157, %cst_38 [1] : vector<16x18xi32> to vector<16xi32>
    %159 = vector.shape_cast %158 : vector<16xi32> to vector<16x1xi32>
    %c12_i32_39 = arith.constant 12 : i32
    %160 = vector.broadcast %c12_i32_39 : i32 to vector<16x1xi32>
    %161 = arith.subi %159, %160 : vector<16x1xi32>
    %162 = vector.shape_cast %138 : vector<1x4xi1> to vector<1x4xi1>
    %163 = vector.broadcast %162 : vector<1x4xi1> to vector<16x4xi1>
    %164 = vector.shape_cast %149 : vector<16x1xf32> to vector<16x1xf32>
    %165 = vector.broadcast %164 : vector<16x1xf32> to vector<16x4xf32>
    %166 = arith.select %163, %165, %129 : vector<16x4xi1>, vector<16x4xf32>
    %167 = vector.shape_cast %138 : vector<1x4xi1> to vector<1x4xi1>
    %168 = vector.broadcast %167 : vector<1x4xi1> to vector<16x4xi1>
    %169 = vector.shape_cast %161 : vector<16x1xi32> to vector<16x1xi32>
    %170 = vector.broadcast %169 : vector<16x1xi32> to vector<16x4xi32>
    %171 = arith.select %168, %170, %134 : vector<16x4xi1>, vector<16x4xi32>
    %cst_40 = arith.constant 1.200000e+01 : f32
    %172 = vector.broadcast %cst_40 : f32 to vector<1x4xf32>
    %173 = arith.select %138, %172, %136 : vector<1x4xi1>, vector<1x4xf32>
    %c0_41 = arith.constant 0 : index
    %c0_42 = arith.constant 0 : index
    %174 = vector.load %arg8[%c0_41, %c0_42] : memref<16x4xi32, #tpu.memory_space<vmem>>, vector<16x4xi32>
    tpu.vector_store %arg8[%c0_41, %c0_42], %171 {strides = array<i32>} : memref<16x4xi32, #tpu.memory_space<vmem>>, vector<16x4xi32>,
    %cst_43 = arith.constant dense<0.000000e+00> : vector<16x18xf32>
    %175 = tpu.matmul %166, %13, %cst_43 {dimension_numbers = #tpu.dot_dimension_numbers<[1], [0], [0], [1], [0, 0, 1, 1], [], []>} : vector<16x4xf32>, vector<4x18xf32>, vector<16x18xf32> -> vector<16x18xf32>
    %176 = vector.broadcast %173 : vector<1x4xf32> to vector<16x4xf32>
    %177 = arith.addf %8, %176 : vector<16x4xf32>
    %cst_44 = arith.constant 3.906250e-03 : f32
    %178 = vector.broadcast %cst_44 : f32 to vector<16x4xf32>
    %179 = arith.mulf %177, %178 : vector<16x4xf32>
    %180 = math.floor %179 : vector<16x4xf32>
    %cst_45 = arith.constant 2.560000e+02 : f32
    %181 = vector.broadcast %cst_45 : f32 to vector<16x4xf32>
    %182 = arith.mulf %180, %181 : vector<16x4xf32>
    %183 = arith.subf %177, %182 : vector<16x4xf32>
    %cst_46 = arith.constant dense<0.000000e+00> : vector<16x18xf32>
    %184 = tpu.matmul %180, %13, %cst_46 {dimension_numbers = #tpu.dot_dimension_numbers<[1], [0], [0], [1], [0, 0, 1, 1], [], []>} : vector<16x4xf32>, vector<4x18xf32>, vector<16x18xf32> -> vector<16x18xf32>
    %cst_47 = arith.constant 2.560000e+02 : f32
    %185 = vector.broadcast %cst_47 : f32 to vector<16x18xf32>
    %186 = arith.mulf %184, %185 : vector<16x18xf32>
    %cst_48 = arith.constant dense<0.000000e+00> : vector<16x18xf32>
    %187 = tpu.matmul %183, %13, %cst_48 {dimension_numbers = #tpu.dot_dimension_numbers<[1], [0], [0], [1], [0, 0, 1, 1], [], []>} : vector<16x4xf32>, vector<4x18xf32>, vector<16x18xf32> -> vector<16x18xf32>
    %188 = arith.addf %186, %187 : vector<16x18xf32>
    %189 = vector.broadcast %21 : vector<1x18xf32> to vector<16x18xf32>
    %190 = arith.cmpf oeq, %189, %188 : vector<16x18xf32>
    %191 = arith.subf %3, %175 : vector<16x18xf32>
    %192 = math.exp %191 : vector<16x18xf32>
    %cst_49 = arith.constant 0.000000e+00 : f32
    %193 = vector.broadcast %cst_49 : f32 to vector<16x18xf32>
    %194 = arith.select %190, %191, %193 : vector<16x18xi1>, vector<16x18xf32>
    %195 = arith.truncf %192 : vector<16x18xf32> to vector<16x18xbf16>
    %196 = arith.extf %195 : vector<16x18xbf16> to vector<16x18xf32>
    %197 = arith.subf %192, %196 : vector<16x18xf32>
    %198 = arith.truncf %194 : vector<16x18xf32> to vector<16x18xbf16>
    %199 = arith.extf %198 : vector<16x18xbf16> to vector<16x18xf32>
    %200 = arith.subf %194, %199 : vector<16x18xf32>
    %cst_50 = arith.constant dense<0.000000e+00> : vector<16x4xf32>
    %201 = tpu.matmul %196, %12, %cst_50 {dimension_numbers = #tpu.dot_dimension_numbers<[1], [0], [0], [1], [0, 0, 1, 1], [], []>} : vector<16x18xf32>, vector<18x4xf32>, vector<16x4xf32> -> vector<16x4xf32>
    %cst_51 = arith.constant dense<0.000000e+00> : vector<16x4xf32>
    %202 = tpu.matmul %197, %12, %cst_51 {dimension_numbers = #tpu.dot_dimension_numbers<[1], [0], [0], [1], [0, 0, 1, 1], [], []>} : vector<16x18xf32>, vector<18x4xf32>, vector<16x4xf32> -> vector<16x4xf32>
    %203 = arith.addf %201, %202 : vector<16x4xf32>
    %cst_52 = arith.constant dense<0.000000e+00> : vector<16x4xf32>
    %204 = tpu.matmul %199, %12, %cst_52 {dimension_numbers = #tpu.dot_dimension_numbers<[1], [0], [0], [1], [0, 0, 1, 1], [], []>} : vector<16x18xf32>, vector<18x4xf32>, vector<16x4xf32> -> vector<16x4xf32>
    %cst_53 = arith.constant dense<0.000000e+00> : vector<16x4xf32>
    %205 = tpu.matmul %200, %12, %cst_53 {dimension_numbers = #tpu.dot_dimension_numbers<[1], [0], [0], [1], [0, 0, 1, 1], [], []>} : vector<16x18xf32>, vector<18x4xf32>, vector<16x4xf32> -> vector<16x4xf32>
    %206 = arith.addf %204, %205 : vector<16x4xf32>
    %207 = math.log %203 : vector<16x4xf32>
    %208 = arith.subf %207, %206 : vector<16x4xf32>
    %c0_54 = arith.constant 0 : index
    %c0_55 = arith.constant 0 : index
    %209 = vector.load %arg9[%c0_54, %c0_55] : memref<1x4xf32, #tpu.memory_space<vmem>>, vector<1x4xf32>
    %210 = arith.mulf %208, %10 : vector<16x4xf32>
    %cst_56 = arith.constant 0.000000e+00 : f32
    %211 = vector.shape_cast %19 : vector<16x1xi1> to vector<16x1xi1>
    %212 = vector.broadcast %211 : vector<16x1xi1> to vector<16x4xi1>
    %213 = vector.broadcast %cst_56 : f32 to vector<16x4xf32>
    %214 = arith.select %212, %210, %213 : vector<16x4xi1>, vector<16x4xf32>
    %cst_57 = arith.constant dense<0.000000e+00> : vector<4xf32>
    %215 = vector.multi_reduction <add>, %214, %cst_57 [0] : vector<16x4xf32> to vector<4xf32>
    %216 = vector.shape_cast %215 : vector<4xf32> to vector<1x4xf32>
    %217 = arith.addf %209, %216 : vector<1x4xf32>
    %c0_58 = arith.constant 0 : index
    %c0_59 = arith.constant 0 : index
    %218 = vector.load %arg9[%c0_58, %c0_59] : memref<1x4xf32, #tpu.memory_space<vmem>>, vector<1x4xf32>
    tpu.vector_store %arg9[%c0_58, %c0_59], %217 {strides = array<i32>} : memref<1x4xf32, #tpu.memory_space<vmem>>, vector<1x4xf32>,
    %c0_60 = arith.constant 0 : index
    %c0_61 = arith.constant 0 : index
    %219 = vector.load %arg10[%c0_60, %c0_61] : memref<1x4xf32, #tpu.memory_space<vmem>>, vector<1x4xf32>
    %cst_62 = arith.constant 0.000000e+00 : f32
    %220 = vector.shape_cast %19 : vector<16x1xi1> to vector<16x1xi1>
    %221 = vector.broadcast %220 : vector<16x1xi1> to vector<16x4xi1>
    %222 = vector.broadcast %cst_62 : f32 to vector<16x4xf32>
    %223 = arith.select %221, %10, %222 : vector<16x4xi1>, vector<16x4xf32>
    %cst_63 = arith.constant dense<0.000000e+00> : vector<4xf32>
    %224 = vector.multi_reduction <add>, %223, %cst_63 [0] : vector<16x4xf32> to vector<4xf32>
    %225 = vector.shape_cast %224 : vector<4xf32> to vector<1x4xf32>
    %226 = arith.addf %219, %225 : vector<1x4xf32>
    %c0_64 = arith.constant 0 : index
    %c0_65 = arith.constant 0 : index
    %227 = vector.load %arg10[%c0_64, %c0_65] : memref<1x4xf32, #tpu.memory_space<vmem>>, vector<1x4xf32>
    tpu.vector_store %arg10[%c0_64, %c0_65], %226 {strides = array<i32>} : memref<1x4xf32, #tpu.memory_space<vmem>>, vector<1x4xf32>,
    %c0_66 = arith.constant 0 : index
    %c0_67 = arith.constant 0 : index
    %228 = vector.load %arg2[%c0_66, %c0_67] : memref<16x4xf32, #tpu.memory_space<vmem>>, vector<16x4xf32>
    %229 = arith.subf %228, %9 : vector<16x4xf32>
    %c0_68 = arith.constant 0 : index
    %c0_69 = arith.constant 0 : index
    %230 = vector.load %arg11[%c0_68, %c0_69] : memref<1x4xf32, #tpu.memory_space<vmem>>, vector<1x4xf32>
    %231 = arith.mulf %229, %229 : vector<16x4xf32>
    %232 = arith.mulf %231, %11 : vector<16x4xf32>
    %cst_70 = arith.constant 0.000000e+00 : f32
    %233 = vector.shape_cast %19 : vector<16x1xi1> to vector<16x1xi1>
    %234 = vector.broadcast %233 : vector<16x1xi1> to vector<16x4xi1>
    %235 = vector.broadcast %cst_70 : f32 to vector<16x4xf32>
    %236 = arith.select %234, %232, %235 : vector<16x4xi1>, vector<16x4xf32>
    %cst_71 = arith.constant dense<0.000000e+00> : vector<4xf32>
    %237 = vector.multi_reduction <add>, %236, %cst_71 [0] : vector<16x4xf32> to vector<4xf32>
    %238 = vector.shape_cast %237 : vector<4xf32> to vector<1x4xf32>
    %239 = arith.addf %230, %238 : vector<1x4xf32>
    %c0_72 = arith.constant 0 : index
    %c0_73 = arith.constant 0 : index
    %240 = vector.load %arg11[%c0_72, %c0_73] : memref<1x4xf32, #tpu.memory_space<vmem>>, vector<1x4xf32>
    tpu.vector_store %arg11[%c0_72, %c0_73], %239 {strides = array<i32>} : memref<1x4xf32, #tpu.memory_space<vmem>>, vector<1x4xf32>,
    %c0_74 = arith.constant 0 : index
    %c0_75 = arith.constant 0 : index
    %241 = vector.load %arg12[%c0_74, %c0_75] : memref<1x4xf32, #tpu.memory_space<vmem>>, vector<1x4xf32>
    %cst_76 = arith.constant 0.000000e+00 : f32
    %242 = vector.shape_cast %19 : vector<16x1xi1> to vector<16x1xi1>
    %243 = vector.broadcast %242 : vector<16x1xi1> to vector<16x4xi1>
    %244 = vector.broadcast %cst_76 : f32 to vector<16x4xf32>
    %245 = arith.select %243, %11, %244 : vector<16x4xi1>, vector<16x4xf32>
    %cst_77 = arith.constant dense<0.000000e+00> : vector<4xf32>
    %246 = vector.multi_reduction <add>, %245, %cst_77 [0] : vector<16x4xf32> to vector<4xf32>
    %247 = vector.shape_cast %246 : vector<4xf32> to vector<1x4xf32>
    %248 = arith.addf %241, %247 : vector<1x4xf32>
    %c0_78 = arith.constant 0 : index
    %c0_79 = arith.constant 0 : index
    %249 = vector.load %arg12[%c0_78, %c0_79] : memref<1x4xf32, #tpu.memory_space<vmem>>, vector<1x4xf32>
    tpu.vector_store %arg12[%c0_78, %c0_79], %248 {strides = array<i32>} : memref<1x4xf32, #tpu.memory_space<vmem>>, vector<1x4xf32>,
    %c0_i32_80 = arith.constant 0 : i32
    %250 = arith.cmpi eq, %arg0, %c0_i32_80 : i32
    %251 = arith.extui %250 : i1 to i32
    %c0_i32_81 = arith.constant 0 : i32
    %252 = arith.cmpi ne, %251, %c0_i32_81 : i32
    scf.if %252 {
      %c0_82 = arith.constant 0 : index
      %c0_83 = arith.constant 0 : index
      %253 = vector.load %arg9[%c0_82, %c0_83] : memref<1x4xf32, #tpu.memory_space<vmem>>, vector<1x4xf32>
      %c0_84 = arith.constant 0 : index
      %c0_85 = arith.constant 0 : index
      %254 = vector.load %arg10[%c0_84, %c0_85] : memref<1x4xf32, #tpu.memory_space<vmem>>, vector<1x4xf32>
      %cst_86 = arith.constant 9.99999993E-9 : f32
      %255 = vector.broadcast %cst_86 : f32 to vector<1x4xf32>
      %256 = arith.addf %254, %255 : vector<1x4xf32>
      %257 = arith.divf %253, %256 : vector<1x4xf32>
      %258 = vector.shape_cast %257 : vector<1x4xf32> to vector<1x1x4xf32>
      %cst_87 = arith.constant dense<0.000000e+00> : vector<1xf32>
      %259 = vector.multi_reduction <add>, %258, %cst_87 [1, 2] : vector<1x1x4xf32> to vector<1xf32>
      %260 = vector.shape_cast %259 : vector<1xf32> to vector<1x1x1xf32>
      %261 = vector.extract %260[0, 0, 0] : f32 from vector<1x1x1xf32>
      %cst_88 = arith.constant 4.000000e+00 : f32
      %262 = arith.divf %261, %cst_88 : f32
      %c0_89 = arith.constant 0 : index
      %c0_90 = arith.constant 0 : index
      %263 = vector.load %arg11[%c0_89, %c0_90] : memref<1x4xf32, #tpu.memory_space<vmem>>, vector<1x4xf32>
      %264 = vector.shape_cast %263 : vector<1x4xf32> to vector<1x1x4xf32>
      %cst_91 = arith.constant dense<0.000000e+00> : vector<1xf32>
      %265 = vector.multi_reduction <add>, %264, %cst_91 [1, 2] : vector<1x1x4xf32> to vector<1xf32>
      %266 = vector.shape_cast %265 : vector<1xf32> to vector<1x1x1xf32>
      %267 = vector.extract %266[0, 0, 0] : f32 from vector<1x1x1xf32>
      %c0_92 = arith.constant 0 : index
      %c0_93 = arith.constant 0 : index
      %268 = vector.load %arg12[%c0_92, %c0_93] : memref<1x4xf32, #tpu.memory_space<vmem>>, vector<1x4xf32>
      %269 = vector.shape_cast %268 : vector<1x4xf32> to vector<1x1x4xf32>
      %cst_94 = arith.constant dense<0.000000e+00> : vector<1xf32>
      %270 = vector.multi_reduction <add>, %269, %cst_94 [1, 2] : vector<1x1x4xf32> to vector<1xf32>
      %271 = vector.shape_cast %270 : vector<1xf32> to vector<1x1x1xf32>
      %272 = vector.extract %271[0, 0, 0] : f32 from vector<1x1x1xf32>
      %cst_95 = arith.constant 9.99999993E-9 : f32
      %273 = arith.addf %272, %cst_95 : f32
      %274 = arith.divf %267, %273 : f32
      %275 = arith.addf %262, %274 : f32
      %cst_96 = arith.constant 5.000000e-01 : f32
      %276 = arith.mulf %275, %cst_96 : f32
      %c0_97 = arith.constant 0 : index
      %c0_98 = arith.constant 0 : index
      %277 = memref.load %arg7[%c0_97, %c0_98] : memref<1x1xf32, #tpu.memory_space<smem>>
      memref.store %276, %arg7[%c0_97, %c0_98] : memref<1x1xf32, #tpu.memory_space<smem>>
    } else {
    }
    return
  }
  func.func @transform_0(%arg0: i32) -> (i32, i32) {
    %c0_i32 = arith.constant 0 : i32
    %c0_i32_0 = arith.constant 0 : i32
    return %arg0, %c0_i32 : i32, i32
  }
  func.func @transform_1(%arg0: i32) -> (i32, i32) {
    %c0_i32 = arith.constant 0 : i32
    %c0_i32_0 = arith.constant 0 : i32
    return %arg0, %c0_i32 : i32, i32
  }
  func.func @transform_2(%arg0: i32) -> (i32, i32) {
    %c0_i32 = arith.constant 0 : i32
    %c0_i32_0 = arith.constant 0 : i32
    return %arg0, %c0_i32 : i32, i32
  }
  func.func @transform_3(%arg0: i32) -> (i32, i32) {
    %c0_i32 = arith.constant 0 : i32
    %c0_i32_0 = arith.constant 0 : i32
    return %arg0, %c0_i32 : i32, i32
  }
  func.func @transform_4(%arg0: i32) -> (i32, i32) {
    %c0_i32 = arith.constant 0 : i32
    %c0_i32_0 = arith.constant 0 : i32
    %c0_i32_1 = arith.constant 0 : i32
    return %c0_i32, %c0_i32_0 : i32, i32
  }
  func.func @transform_5(%arg0: i32) -> (i32, i32) {
    %c0_i32 = arith.constant 0 : i32
    %c0_i32_0 = arith.constant 0 : i32
    %c0_i32_1 = arith.constant 0 : i32
    return %c0_i32, %c0_i32_0 : i32, i32
  }
  func.func @transform_6(%arg0: i32) -> (i32, i32) {
    %c0_i32 = arith.constant 0 : i32
    %c0_i32_0 = arith.constant 0 : i32
    %c0_i32_1 = arith.constant 0 : i32
    return %c0_i32, %c0_i32_0 : i32, i32
  }
  func.func @transform_7(%arg0: i32) -> (i32, i32) {
    %c0_i32 = arith.constant 0 : i32
    %c0_i32_0 = arith.constant 0 : i32
    return %arg0, %c0_i32 : i32, i32
  }
}

</mosaic_0001>

<llo_original>
// kernel: tpu_custom_call.1
$region0: #{tpu_custom_call.1}
  #allocation0 [shape = 'u32[]', space=smem, size = 0x4, offset = 0x4, fixed_abs, tag = 'smem constant byte address 0x4 - core index']
  #allocation1 [shape = 'u32[144,128]{1,0:T(1,128)}', space=vmem, size = 0x12000, scoped, tag = 'internal scratch']
  #allocation2 [shape = 'f32[1,4]{1,0:T(1,128)}', space=vmem, size = 0x200, scoped, tag = 'scratch operand']
  #allocation3 [shape = 'f32[1,4]{1,0:T(1,128)}', space=vmem, size = 0x200, scoped, tag = 'scratch operand']
  #allocation4 [shape = 'f32[1,4]{1,0:T(1,128)}', space=vmem, size = 0x200, scoped, tag = 'scratch operand']
  #allocation5 [shape = 'f32[1,4]{1,0:T(1,128)}', space=vmem, size = 0x200, scoped, tag = 'scratch operand']
  %s0 = inlined_call_operand.vmem [shape: f32[13,18], index: 0, kind: input, shape index: {}]
  %s1 = inlined_call_operand.vmem [shape: f32[13,4], index: 1, kind: input, shape index: {}]
  %s2 = inlined_call_operand.vmem [shape: f32[13,8], index: 2, kind: input, shape index: {}]
  %s3 = inlined_call_operand.vmem [shape: f32[13,8], index: 3, kind: input, shape index: {}]
  %s4 = inlined_call_operand.vmem [shape: f32[18,4], index: 4, kind: input, shape index: {}]
  %s5 = inlined_call_operand.vmem [shape: f32[4,18], index: 5, kind: input, shape index: {}]
  %s6 = inlined_call_operand.hbm [shape: f32[1,1], index: 6, kind: output, shape index: {0}]
  %s7 = inlined_call_operand.vmem [shape: s32[13,4], index: 7, kind: output, shape index: {1}]
  %8 = xla_tuple %s6, %s7
  %s9 = sld [smem:[#allocation0]]
  $region50: #{tpu_custom_call.1} parent=0
    _
  %s11 = ssub.s32 1, %s9
  %s12 = scalar_select 0, %s11, %s9
  $region1: #{tpu_custom_call.1} parent=0
    #allocation6 [shape = 'u8[512]{0}', space=smem, size = 0x200, scoped, tag = 'output window, operand 0, single buffered']
    #allocation7 [shape = 's32[1]{0}', space=sflag, size = 0x4, scoped, tag = 'scoped memory for tpu_custom_call.1']
    %13 = vsyncpa [#allocation7], 0
    // Predicated region
    $region2: #{tpu_custom_call.1} parent=1 // pred_check
      _
    $region3: #{tpu_custom_call.1} parent=1 // pred_check_branch
      %15 = sbr.rel (0) target = $region5
    $region4: #{tpu_custom_call.1} parent=1 // pred_region
      _
    $region5: #{tpu_custom_call.1} parent=1 // pred_fallthru
      _
    // Predicated region
    $region6: #{tpu_custom_call.1} parent=1 // pred_check
      _
    $region7: #{tpu_custom_call.1} parent=1 // pred_check_branch
      %17 = sbr.rel (0) target = $region9
    $region8: #{tpu_custom_call.1} parent=1 // pred_region
      _
    $region9: #{tpu_custom_call.1} parent=1 // pred_fallthru
      _
    // Predicated region
    $region10: #{tpu_custom_call.1} parent=1 // pred_check
      _
    $region11: #{tpu_custom_call.1} parent=1 // pred_check_branch
      %19 = sbr.rel (0) target = $region13
    $region12: #{tpu_custom_call.1} parent=1 // pred_region
      _
    $region13: #{tpu_custom_call.1} parent=1 // pred_fallthru
      _
    // Predicated region
    $region14: #{tpu_custom_call.1} parent=1 // pred_check
      _
    $region15: #{tpu_custom_call.1} parent=1 // pred_check_branch
      %21 = sbr.rel (0) target = $region17
    $region16: #{tpu_custom_call.1} parent=1 // pred_region
      _
    $region17: #{tpu_custom_call.1} parent=1 // pred_fallthru
      _
    // Predicated region
    $region18: #{tpu_custom_call.1} parent=1 // pred_check
      _
    $region19: #{tpu_custom_call.1} parent=1 // pred_check_branch
      %23 = sbr.rel (0) target = $region21
    $region20: #{tpu_custom_call.1} parent=1 // pred_region
      _
    $region21: #{tpu_custom_call.1} parent=1 // pred_fallthru
      _
    // Predicated region
    $region22: #{tpu_custom_call.1} parent=1 // pred_check
      _
    $region23: #{tpu_custom_call.1} parent=1 // pred_check_branch
      %25 = sbr.rel (0) target = $region25
    $region24: #{tpu_custom_call.1} parent=1 // pred_region
      _
    $region25: #{tpu_custom_call.1} parent=1 // pred_fallthru
      _
    %p26 = scmp.eq.s32.totalorder 0, 0
    // Predicated region
    $region26: #{tpu_custom_call.1} parent=1 // pred_check
      %p27 = pneg %p26
    $region27: #{tpu_custom_call.1} parent=1 // pred_check_branch
      %29 = sbr.rel (%p27) target = $region29
    $region28: #{tpu_custom_call.1} parent=1 // pred_region
      %vm30 = vcmask 24576
      %31 = vst.msk [vmem:[#allocation2] sm:$0x1] %vm30, 0.0
      %32 = vst.msk [vmem:[#allocation3] sm:$0x1] %vm30, 0.0
      %33 = vst.msk [vmem:[#allocation4] sm:$0x1] %vm30, 0.0
      %34 = vst.msk [vmem:[#allocation5] sm:$0x1] %vm30, 0.0
    $region29: #{tpu_custom_call.1} parent=1 // pred_fallthru
      _
    %v35 = vld [vmem:[%s0] sm:$0xff]
    %v36 = vld [vmem:[%s0 + $0x8] sm:$0xff]
    %v37 = vld [vmem:[%s2] sm:$0xff]
    %v38 = vld [vmem:[%s2 + $0x8] sm:$0xff]
    %v39 = vld [vmem:[%s3] sm:$0xff]
    %v40 = vld [vmem:[%s3 + $0x8] sm:$0xff]
    %v41 = vcvt.f32.s32.to.zero.pseudo %v37
    %v42 = vcvt.f32.s32.to.zero.pseudo %v38
    %v43 = vcvt.s32.f32 %v41
    %v44 = vcvt.s32.f32 %v42
    %v45 = vld [vmem:[%s4] sm:$0xff]
    %v46 = vld [vmem:[%s4 + $0x8] sm:$0xff]
    %v47 = vld [vmem:[%s4 + $0x10] sm:$0x3]
    %v48 = vld [vmem:[%s5] sm:$0xf]
    %s49 = smul.u32 0, 16
    %v50 = vlaneseq
    %v51 = vshrl.u32 %v50, 7
    %v52 = vadd.s32 %v51, 8
    %v53 = vstv %s49
    %v54 = vadd.s32 %v53, %v51
    %v55 = vadd.s32 %v53, %v52
    %vm56 = vcmp.lt.s32.totalorder %v54, 13
    %vm57 = vcmp.lt.s32.totalorder %v55, 13
    %v58 = vlaneseq
    %v59 = vand.u32 %v58, 127
    %v60 = vcvt.s32.f32 %v59
    %vm61 = vcmp.eq.s32.totalorder %v59, 0
    %vm62 = vcmp.ge.s32.totalorder %v59, 0
    %vm63 = vcmp.lt.s32.totalorder %v59, 3
    %vm64 = vmand %vm62, %vm63
    %v65 = vsel %vm64, 1, 0
    %vm66 = vcmp.eq.s32.totalorder %v65, 1
    %v67 = vsel %vm66, %v35, -1e+30
    %v68 = vsel %vm66, %v36, -1e+30
    %vm69 = vcmask 146432
    %v70 = vsel %vm69, %v67, -inf
    %71 = vmax.xlane.f32.xlu0 %v70
    %v72 = vpop.xlane.xlu0 %71
    %v73 = vsel %vm69, %v68, -inf
    %74 = vmax.xlane.f32.xlu0 %v73
    %v75 = vpop.xlane.xlu0 %74
    %vm76 = vcmp.eq.f32.partialorder %v67, %v72
    %vm77 = vcmp.eq.f32.partialorder %v68, %v75
    %vm78 = vmand %vm76, %vm66
    %vm79 = vmand %vm77, %vm66
    %v80 = vsel %vm78, %v59, 1073741824
    %v81 = vsel %vm79, %v59, 1073741824
    %v82 = vsel %vm69, %v80, 2147483647
    %v83 = vand.u32 %v82, 65535
    %v84 = vshra.s32 %v82, 16
    %v85 = vcvt.s32.f32 %v83
    %v86 = vcvt.s32.f32 %v84
    %87 = vmin.xlane.f32.xlu0 %v86
    %v88 = vpop.xlane.xlu0 %87
    %vm89 = vcmp.eq.f32.partialorder %v86, %v88
    %v90 = vsel %vm89, %v85, inf
    %91 = vmin.xlane.f32.xlu0 %v90
    %v92 = vpop.xlane.xlu0 %91
    %v93 = vcvt.f32.s32 %v92
    %v94 = vcvt.f32.s32 %v88
    %v95 = vshll.u32 %v94, 16
    %v96 = vadd.s32 %v95, %v93
    %v97 = vsel %vm69, %v81, 2147483647
    %v98 = vand.u32 %v97, 65535
    %v99 = vshra.s32 %v97, 16
    %v100 = vcvt.s32.f32 %v98
    %v101 = vcvt.s32.f32 %v99
    %102 = vmin.xlane.f32.xlu0 %v101
    %v103 = vpop.xlane.xlu0 %102
    %vm104 = vcmp.eq.f32.partialorder %v101, %v103
    %v105 = vsel %vm104, %v100, inf
    %106 = vmin.xlane.f32.xlu0 %v105
    %v107 = vpop.xlane.xlu0 %106
    %v108 = vcvt.f32.s32 %v107
    %v109 = vcvt.f32.s32 %v103
    %v110 = vshll.u32 %v109, 16
    %v111 = vadd.s32 %v110, %v108
    %v112 = vsel %vm61, 1, 0
    %vm113 = vcmp.eq.s32.totalorder %v112, 1
    %v114 = vsel %vm113, %v72, 0.0
    %v115 = vsel %vm113, %v75, 0.0
    %v116 = vsel %vm113, %v96, 0
    %v117 = vsel %vm113, %v111, 0
    %vm118 = vcmp.eq.s32.totalorder %v59, 1
    %vm119 = vcmp.ge.s32.totalorder %v59, 3
    %vm120 = vcmp.lt.s32.totalorder %v59, 8
    %vm121 = vmand %vm119, %vm120
    %v122 = vsel %vm121, 1, 0
    %vm123 = vcmp.eq.s32.totalorder %v122, 1
    %v124 = vsel %vm123, %v35, -1e+30
    %v125 = vsel %vm123, %v36, -1e+30
    %v126 = vsel %vm69, %v124, -inf
    %127 = vmax.xlane.f32.xlu0 %v126
    %v128 = vpop.xlane.xlu0 %127
    %v129 = vsel %vm69, %v125, -inf
    %130 = vmax.xlane.f32.xlu0 %v129
    %v131 = vpop.xlane.xlu0 %130
    %vm132 = vcmp.eq.f32.partialorder %v124, %v128
    %vm133 = vcmp.eq.f32.partialorder %v125, %v131
    %vm134 = vmand %vm132, %vm123
    %vm135 = vmand %vm133, %vm123
    %v136 = vsel %vm134, %v59, 1073741824
    %v137 = vsel %vm135, %v59, 1073741824
    %v138 = vsel %vm69, %v136, 2147483647
    %v139 = vand.u32 %v138, 65535
    %v140 = vshra.s32 %v138, 16
    %v141 = vcvt.s32.f32 %v139
    %v142 = vcvt.s32.f32 %v140
    %143 = vmin.xlane.f32.xlu0 %v142
    %v144 = vpop.xlane.xlu0 %143
    %vm145 = vcmp.eq.f32.partialorder %v142, %v144
    %v146 = vsel %vm145, %v141, inf
    %147 = vmin.xlane.f32.xlu0 %v146
    %v148 = vpop.xlane.xlu0 %147
    %v149 = vcvt.f32.s32 %v148
    %v150 = vcvt.f32.s32 %v144
    %v151 = vshll.u32 %v150, 16
    %v152 = vadd.s32 %v151, %v149
    %v153 = vsel %vm69, %v137, 2147483647
    %v154 = vand.u32 %v153, 65535
    %v155 = vshra.s32 %v153, 16
    %v156 = vcvt.s32.f32 %v154
    %v157 = vcvt.s32.f32 %v155
    %158 = vmin.xlane.f32.xlu0 %v157
    %v159 = vpop.xlane.xlu0 %158
    %vm160 = vcmp.eq.f32.partialorder %v157, %v159
    %v161 = vsel %vm160, %v156, inf
    %162 = vmin.xlane.f32.xlu0 %v161
    %v163 = vpop.xlane.xlu0 %162
    %v164 = vcvt.f32.s32 %v163
    %v165 = vcvt.f32.s32 %v159
    %v166 = vshll.u32 %v165, 16
    %v167 = vadd.s32 %v166, %v164
    %v168 = vsub.s32 %v152, 3
    %v169 = vsub.s32 %v167, 3
    %v170 = vsel %vm118, 1, 0
    %vm171 = vcmp.eq.s32.totalorder %v170, 1
    %v172 = vsel %vm171, %v128, %v114
    %v173 = vsel %vm171, %v131, %v115
    %v174 = vsel %vm171, %v168, %v116
    %v175 = vsel %vm171, %v169, %v117
    %v176 = vsel %vm118, 3.0, 0.0
    %vm177 = vcmp.eq.s32.totalorder %v59, 2
    %vm178 = vcmp.ge.s32.totalorder %v59, 8
    %vm179 = vcmp.lt.s32.totalorder %v59, 12
    %vm180 = vmand %vm178, %vm179
    %v181 = vsel %vm180, 1, 0
    %vm182 = vcmp.eq.s32.totalorder %v181, 1
    %v183 = vsel %vm182, %v35, -1e+30
    %v184 = vsel %vm182, %v36, -1e+30
    %v185 = vsel %vm69, %v183, -inf
    %186 = vmax.xlane.f32.xlu0 %v185
    %v187 = vpop.xlane.xlu0 %186
    %v188 = vsel %vm69, %v184, -inf
    %189 = vmax.xlane.f32.xlu0 %v188
    %v190 = vpop.xlane.xlu0 %189
    %vm191 = vcmp.eq.f32.partialorder %v183, %v187
    %vm192 = vcmp.eq.f32.partialorder %v184, %v190
    %vm193 = vmand %vm191, %vm182
    %vm194 = vmand %vm192, %vm182
    %v195 = vsel %vm193, %v59, 1073741824
    %v196 = vsel %vm194, %v59, 1073741824
    %v197 = vsel %vm69, %v195, 2147483647
    %v198 = vand.u32 %v197, 65535
    %v199 = vshra.s32 %v197, 16
    %v200 = vcvt.s32.f32 %v198
    %v201 = vcvt.s32.f32 %v199
    %202 = vmin.xlane.f32.xlu0 %v201
    %v203 = vpop.xlane.xlu0 %202
    %vm204 = vcmp.eq.f32.partialorder %v201, %v203
    %v205 = vsel %vm204, %v200, inf
    %206 = vmin.xlane.f32.xlu0 %v205
    %v207 = vpop.xlane.xlu0 %206
    %v208 = vcvt.f32.s32 %v207
    %v209 = vcvt.f32.s32 %v203
    %v210 = vshll.u32 %v209, 16
    %v211 = vadd.s32 %v210, %v208
    %v212 = vsel %vm69, %v196, 2147483647
    %v213 = vand.u32 %v212, 65535
    %v214 = vshra.s32 %v212, 16
    %v215 = vcvt.s32.f32 %v213
    %v216 = vcvt.s32.f32 %v214
    %217 = vmin.xlane.f32.xlu0 %v216
    %v218 = vpop.xlane.xlu0 %217
    %vm219 = vcmp.eq.f32.partialorder %v216, %v218
    %v220 = vsel %vm219, %v215, inf
    %221 = vmin.xlane.f32.xlu0 %v220
    %v222 = vpop.xlane.xlu0 %221
    %v223 = vcvt.f32.s32 %v222
    %v224 = vcvt.f32.s32 %v218
    %v225 = vshll.u32 %v224, 16
    %v226 = vadd.s32 %v225, %v223
    %v227 = vsub.s32 %v211, 8
    %v228 = vsub.s32 %v226, 8
    %v229 = vsel %vm177, 1, 0
    %vm230 = vcmp.eq.s32.totalorder %v229, 1
    %v231 = vsel %vm230, %v187, %v172
    %v232 = vsel %vm230, %v190, %v173
    %v233 = vsel %vm230, %v227, %v174
    %v234 = vsel %vm230, %v228, %v175
    %v235 = vsel %vm177, 8.0, %v176
    %vm236 = vcmp.eq.s32.totalorder %v59, 3
    %vm237 = vcmp.ge.s32.totalorder %v59, 12
    %vm238 = vcmp.lt.s32.totalorder %v59, 18
    %vm239 = vmand %vm237, %vm238
    %v240 = vsel %vm239, 1, 0
    %vm241 = vcmp.eq.s32.totalorder %v240, 1
    %v242 = vsel %vm241, %v35, -1e+30
    %v243 = vsel %vm241, %v36, -1e+30
    %v244 = vsel %vm69, %v242, -inf
    %245 = vmax.xlane.f32.xlu0 %v244
    %v246 = vpop.xlane.xlu0 %245
    %v247 = vsel %vm69, %v243, -inf
    %248 = vmax.xlane.f32.xlu0 %v247
    %v249 = vpop.xlane.xlu0 %248
    %vm250 = vcmp.eq.f32.partialorder %v242, %v246
    %vm251 = vcmp.eq.f32.partialorder %v243, %v249
    %vm252 = vmand %vm250, %vm241
    %vm253 = vmand %vm251, %vm241
    %v254 = vsel %vm252, %v59, 1073741824
    %v255 = vsel %vm253, %v59, 1073741824
    %v256 = vsel %vm69, %v254, 2147483647
    %v257 = vand.u32 %v256, 65535
    %v258 = vshra.s32 %v256, 16
    %v259 = vcvt.s32.f32 %v257
    %v260 = vcvt.s32.f32 %v258
    %261 = vmin.xlane.f32.xlu0 %v260
    %v262 = vpop.xlane.xlu0 %261
    %vm263 = vcmp.eq.f32.partialorder %v260, %v262
    %v264 = vsel %vm263, %v259, inf
    %265 = vmin.xlane.f32.xlu0 %v264
    %v266 = vpop.xlane.xlu0 %265
    %v267 = vcvt.f32.s32 %v266
    %v268 = vcvt.f32.s32 %v262
    %v269 = vshll.u32 %v268, 16
    %v270 = vadd.s32 %v269, %v267
    %v271 = vsel %vm69, %v255, 2147483647
    %v272 = vand.u32 %v271, 65535
    %v273 = vshra.s32 %v271, 16
    %v274 = vcvt.s32.f32 %v272
    %v275 = vcvt.s32.f32 %v273
    %276 = vmin.xlane.f32.xlu0 %v275
    %v277 = vpop.xlane.xlu0 %276
    %vm278 = vcmp.eq.f32.partialorder %v275, %v277
    %v279 = vsel %vm278, %v274, inf
    %280 = vmin.xlane.f32.xlu0 %v279
    %v281 = vpop.xlane.xlu0 %280
    %v282 = vcvt.f32.s32 %v281
    %v283 = vcvt.f32.s32 %v277
    %v284 = vshll.u32 %v283, 16
    %v285 = vadd.s32 %v284, %v282
    %v286 = vsub.s32 %v270, 12
    %v287 = vsub.s32 %v285, 12
    %v288 = vsel %vm236, 1, 0
    %vm289 = vcmp.eq.s32.totalorder %v288, 1
    %v290 = vsel %vm289, %v246, %v231
    %v291 = vsel %vm289, %v249, %v232
    %v292 = vsel %vm289, %v286, %v233
    %v293 = vsel %vm289, %v287, %v234
    %v294 = vsel %vm236, 12.0, %v235
    %vm295 = vcmask 31744
    %296 = vst.msk [vmem:[%s7] sm:$0xff] %vm295, %v292
    %297 = vst.msk [vmem:[%s7 + $0x8] sm:$0xff] %vm295, %v293
    %v299 = vsel %vm295, %v290, 0
    %v302 = vsel %vm295, %v291, 0
    %vm304 = vcmask 1043456
    %v306 = vsel %vm304, %v48, 0
    %308 = vmatprep.subr.mxu0 0.0
    %309 = vmatpush1.msra.mxu0 0.0
    %310 = vmatprep.subr.mxu0 0.0
    %311 = vmatpush1.msra.mxu0 0.0
    %312 = vmatprep.subr.mxu0 0.0
    %313 = vmatpush1.msra.mxu0 0.0
    %314 = vmatprep.subr.mxu0 0.0
    %315 = vmatpush1.msra.mxu0 0.0
    %316 = vmatprep.subr.mxu0 0.0
    %317 = vmatpush1.msra.mxu0 0.0
    %318 = vmatprep.subr.mxu0 0.0
    %319 = vmatpush1.msra.mxu0 0.0
    %320 = vmatprep.subr.mxu0 0.0
    %321 = vmatpush1.msra.mxu0 0.0
    %322 = vmatprep.subr.mxu0 0.0
    %323 = vmatpush1.msra.mxu0 0.0
    %324 = vmatprep.subr.mxu0 0.0
    %325 = vmatpush1.msra.mxu0 0.0
    %326 = vmatprep.subr.mxu0 0.0
    %327 = vmatpush1.msra.mxu0 0.0
    %328 = vmatprep.subr.mxu0 0.0
    %329 = vmatpush1.msra.mxu0 0.0
    %330 = vmatprep.subr.mxu0 0.0
    %331 = vmatpush1.msra.mxu0 0.0
    %332 = vmatprep.subr.mxu0 0.0
    %333 = vmatpush1.msra.mxu0 0.0
    %334 = vmatprep.subr.mxu0 0.0
    %335 = vmatpush1.msra.mxu0 0.0
    %336 = vmatprep.subr.mxu0 0.0
    %337 = vmatpush1.msra.mxu0 0.0
    %338 = vmatprep.subr.mxu0 0.0
    %339 = vmatpush1.msra.mxu0 %v306
    %340 = vmatprep.subr.mxu0 0.0
    %341 = vmatpush2.msra.mxu0 0.0
    %342 = vmatprep.subr.mxu0 0.0
    %343 = vmatpush2.msra.mxu0 0.0
    %344 = vmatprep.subr.mxu0 0.0
    %345 = vmatpush2.msra.mxu0 0.0
    %346 = vmatprep.subr.mxu0 0.0
    %347 = vmatpush2.msra.mxu0 0.0
    %348 = vmatprep.subr.mxu0 0.0
    %349 = vmatpush2.msra.mxu0 0.0
    %350 = vmatprep.subr.mxu0 0.0
    %351 = vmatpush2.msra.mxu0 0.0
    %352 = vmatprep.subr.mxu0 0.0
    %353 = vmatpush2.msra.mxu0 0.0
    %354 = vmatprep.subr.mxu0 0.0
    %355 = vmatpush2.msra.mxu0 0.0
    %356 = vmatprep.subr.mxu0 0.0
    %357 = vmatpush2.msra.mxu0 0.0
    %358 = vmatprep.subr.mxu0 0.0
    %359 = vmatpush2.msra.mxu0 0.0
    %360 = vmatprep.subr.mxu0 0.0
    %361 = vmatpush2.msra.mxu0 0.0
    %362 = vmatprep.subr.mxu0 0.0
    %363 = vmatpush2.msra.mxu0 0.0
    %364 = vmatprep.subr.mxu0 0.0
    %365 = vmatpush2.msra.mxu0 0.0
    %366 = vmatprep.subr.mxu0 0.0
    %367 = vmatpush2.msra.mxu0 0.0
    %368 = vmatprep.subr.mxu0 0.0
    %369 = vmatpush2.msra.mxu0 0.0
    %370 = vmatprep.subr.mxu0 0.0
    %371 = vmatpush2.msra.mxu0 0.0
    %372 = vmatprep.mubr.f32.mxu0 0.0
    %373 = vmatmul.mubr.f32.gmra.mxu0 %v299
    %v374 = vpop.f32.mrf.mxu0
    %v375 = vadd.f32 0.0, %v374
    %v376 = vpop.f32.mrf.mxu0
    %377 = vmatprep.mubr.f32.mxu0 0.0
    %378 = vmatmul.mubr.f32.gmra.mxu0 %v302
    %v379 = vpop.f32.mrf.mxu0
    %v380 = vadd.f32 0.0, %v379
    %v381 = vpop.f32.mrf.mxu0
    %382 = vdwg.mxu0
    %v383 = vadd.f32 %v43, %v294
    %v384 = vadd.f32 %v44, %v294
    %v385 = vmul.f32 %v383, 0.00390625
    %v386 = vmul.f32 %v384, 0.00390625
    %v387 = vfloor.f32 %v385
    %v388 = vfloor.f32 %v386
    %v389 = vmul.f32 %v387, 256.0
    %v390 = vmul.f32 %v388, 256.0
    %v391 = vsub.f32 %v383, %v389
    %v392 = vsub.f32 %v384, %v390
    %v394 = vsel %vm295, %v387, 0
    %v397 = vsel %vm295, %v388, 0
    %399 = vmatprep.subr.mxu0 0.0
    %400 = vmatpush1.msra.mxu0 0.0
    %401 = vmatprep.subr.mxu0 0.0
    %402 = vmatpush1.msra.mxu0 0.0
    %403 = vmatprep.subr.mxu0 0.0
    %404 = vmatpush1.msra.mxu0 0.0
    %405 = vmatprep.subr.mxu0 0.0
    %406 = vmatpush1.msra.mxu0 0.0
    %407 = vmatprep.subr.mxu0 0.0
    %408 = vmatpush1.msra.mxu0 0.0
    %409 = vmatprep.subr.mxu0 0.0
    %410 = vmatpush1.msra.mxu0 0.0
    %411 = vmatprep.subr.mxu0 0.0
    %412 = vmatpush1.msra.mxu0 0.0
    %413 = vmatprep.subr.mxu0 0.0
    %414 = vmatpush1.msra.mxu0 0.0
    %415 = vmatprep.subr.mxu0 0.0
    %416 = vmatpush1.msra.mxu0 0.0
    %417 = vmatprep.subr.mxu0 0.0
    %418 = vmatpush1.msra.mxu0 0.0
    %419 = vmatprep.subr.mxu0 0.0
    %420 = vmatpush1.msra.mxu0 0.0
    %421 = vmatprep.subr.mxu0 0.0
    %422 = vmatpush1.msra.mxu0 0.0
    %423 = vmatprep.subr.mxu0 0.0
    %424 = vmatpush1.msra.mxu0 0.0
    %425 = vmatprep.subr.mxu0 0.0
    %426 = vmatpush1.msra.mxu0 0.0
    %427 = vmatprep.subr.mxu0 0.0
    %428 = vmatpush1.msra.mxu0 0.0
    %429 = vmatprep.subr.mxu0 0.0
    %430 = vmatpush1.msra.mxu0 %v306
    %431 = vmatprep.subr.mxu0 0.0
    %432 = vmatpush2.msra.mxu0 0.0
    %433 = vmatprep.subr.mxu0 0.0
    %434 = vmatpush2.msra.mxu0 0.0
    %435 = vmatprep.subr.mxu0 0.0
    %436 = vmatpush2.msra.mxu0 0.0
    %437 = vmatprep.subr.mxu0 0.0
    %438 = vmatpush2.msra.mxu0 0.0
    %439 = vmatprep.subr.mxu0 0.0
    %440 = vmatpush2.msra.mxu0 0.0
    %441 = vmatprep.subr.mxu0 0.0
    %442 = vmatpush2.msra.mxu0 0.0
    %443 = vmatprep.subr.mxu0 0.0
    %444 = vmatpush2.msra.mxu0 0.0
    %445 = vmatprep.subr.mxu0 0.0
    %446 = vmatpush2.msra.mxu0 0.0
    %447 = vmatprep.subr.mxu0 0.0
    %448 = vmatpush2.msra.mxu0 0.0
    %449 = vmatprep.subr.mxu0 0.0
    %450 = vmatpush2.msra.mxu0 0.0
    %451 = vmatprep.subr.mxu0 0.0
    %452 = vmatpush2.msra.mxu0 0.0
    %453 = vmatprep.subr.mxu0 0.0
    %454 = vmatpush2.msra.mxu0 0.0
    %455 = vmatprep.subr.mxu0 0.0
    %456 = vmatpush2.msra.mxu0 0.0
    %457 = vmatprep.subr.mxu0 0.0
    %458 = vmatpush2.msra.mxu0 0.0
    %459 = vmatprep.subr.mxu0 0.0
    %460 = vmatpush2.msra.mxu0 0.0
    %461 = vmatprep.subr.mxu0 0.0
    %462 = vmatpush2.msra.mxu0 0.0
    %463 = vmatprep.mubr.f32.mxu0 0.0
    %464 = vmatmul.mubr.f32.gmra.mxu0 %v394
    %v465 = vpop.f32.mrf.mxu0
    %v466 = vadd.f32 0.0, %v465
    %v467 = vpop.f32.mrf.mxu0
    %468 = vmatprep.mubr.f32.mxu0 0.0
    %469 = vmatmul.mubr.f32.gmra.mxu0 %v397
    %v470 = vpop.f32.mrf.mxu0
    %v471 = vadd.f32 0.0, %v470
    %v472 = vpop.f32.mrf.mxu0
    %473 = vdwg.mxu0
    %v474 = vmul.f32 %v466, 256.0
    %v475 = vmul.f32 %v471, 256.0
    %v477 = vsel %vm295, %v391, 0
    %v480 = vsel %vm295, %v392, 0
    %482 = vmatprep.subr.mxu0 0.0
    %483 = vmatpush1.msra.mxu0 0.0
    %484 = vmatprep.subr.mxu0 0.0
    %485 = vmatpush1.msra.mxu0 0.0
    %486 = vmatprep.subr.mxu0 0.0
    %487 = vmatpush1.msra.mxu0 0.0
    %488 = vmatprep.subr.mxu0 0.0
    %489 = vmatpush1.msra.mxu0 0.0
    %490 = vmatprep.subr.mxu0 0.0
    %491 = vmatpush1.msra.mxu0 0.0
    %492 = vmatprep.subr.mxu0 0.0
    %493 = vmatpush1.msra.mxu0 0.0
    %494 = vmatprep.subr.mxu0 0.0
    %495 = vmatpush1.msra.mxu0 0.0
    %496 = vmatprep.subr.mxu0 0.0
    %497 = vmatpush1.msra.mxu0 0.0
    %498 = vmatprep.subr.mxu0 0.0
    %499 = vmatpush1.msra.mxu0 0.0
    %500 = vmatprep.subr.mxu0 0.0
    %501 = vmatpush1.msra.mxu0 0.0
    %502 = vmatprep.subr.mxu0 0.0
    %503 = vmatpush1.msra.mxu0 0.0
    %504 = vmatprep.subr.mxu0 0.0
    %505 = vmatpush1.msra.mxu0 0.0
    %506 = vmatprep.subr.mxu0 0.0
    %507 = vmatpush1.msra.mxu0 0.0
    %508 = vmatprep.subr.mxu0 0.0
    %509 = vmatpush1.msra.mxu0 0.0
    %510 = vmatprep.subr.mxu0 0.0
    %511 = vmatpush1.msra.mxu0 0.0
    %512 = vmatprep.subr.mxu0 0.0
    %513 = vmatpush1.msra.mxu0 %v306
    %514 = vmatprep.subr.mxu0 0.0
    %515 = vmatpush2.msra.mxu0 0.0
    %516 = vmatprep.subr.mxu0 0.0
    %517 = vmatpush2.msra.mxu0 0.0
    %518 = vmatprep.subr.mxu0 0.0
    %519 = vmatpush2.msra.mxu0 0.0
    %520 = vmatprep.subr.mxu0 0.0
    %521 = vmatpush2.msra.mxu0 0.0
    %522 = vmatprep.subr.mxu0 0.0
    %523 = vmatpush2.msra.mxu0 0.0
    %524 = vmatprep.subr.mxu0 0.0
    %525 = vmatpush2.msra.mxu0 0.0
    %526 = vmatprep.subr.mxu0 0.0
    %527 = vmatpush2.msra.mxu0 0.0
    %528 = vmatprep.subr.mxu0 0.0
    %529 = vmatpush2.msra.mxu0 0.0
    %530 = vmatprep.subr.mxu0 0.0
    %531 = vmatpush2.msra.mxu0 0.0
    %532 = vmatprep.subr.mxu0 0.0
    %533 = vmatpush2.msra.mxu0 0.0
    %534 = vmatprep.subr.mxu0 0.0
    %535 = vmatpush2.msra.mxu0 0.0
    %536 = vmatprep.subr.mxu0 0.0
    %537 = vmatpush2.msra.mxu0 0.0
    %538 = vmatprep.subr.mxu0 0.0
    %539 = vmatpush2.msra.mxu0 0.0
    %540 = vmatprep.subr.mxu0 0.0
    %541 = vmatpush2.msra.mxu0 0.0
    %542 = vmatprep.subr.mxu0 0.0
    %543 = vmatpush2.msra.mxu0 0.0
    %544 = vmatprep.subr.mxu0 0.0
    %545 = vmatpush2.msra.mxu0 0.0
    %546 = vmatprep.mubr.f32.mxu0 0.0
    %547 = vmatmul.mubr.f32.gmra.mxu0 %v477
    %v548 = vpop.f32.mrf.mxu0
    %v549 = vadd.f32 0.0, %v548
    %v550 = vpop.f32.mrf.mxu0
    %551 = vmatprep.mubr.f32.mxu0 0.0
    %552 = vmatmul.mubr.f32.gmra.mxu0 %v480
    %v553 = vpop.f32.mrf.mxu0
    %v554 = vadd.f32 0.0, %v553
    %v555 = vpop.f32.mrf.mxu0
    %556 = vdwg.mxu0
    %v557 = vadd.f32 %v474, %v549
    %v558 = vadd.f32 %v475, %v554
    %vm559 = vcmp.eq.f32.partialorder %v60, %v557
    %vm560 = vcmp.eq.f32.partialorder %v60, %v558
    %v561 = vsub.f32 %v35, %v375
    %v562 = vsub.f32 %v36, %v380
    %v563 = vmul.f32 %v561, 1.442695
    %v564 = vpow.pop %v563
    %v565 = vmul.f32 %v562, 1.442695
    %v566 = vpow.pop %v565
    %v567 = vsel %vm559, %v561, 0.0
    %v568 = vsel %vm560, %v562, 0.0
    %v569 = vpack.c.bf16 %v566, %v564
    %v570 = vunpack.c.l.bf16 %v569
    %v571 = vunpack.c.h.bf16 %v569
    %v572 = vsub.f32 %v564, %v570
    %v573 = vsub.f32 %v566, %v571
    %v574 = vpack.c.bf16 %v568, %v567
    %v575 = vunpack.c.l.bf16 %v574
    %v576 = vunpack.c.h.bf16 %v574
    %v577 = vsub.f32 %v567, %v575
    %v578 = vsub.f32 %v568, %v576
    %v580 = vsel %vm69, %v572, 0
    %v583 = vsel %vm69, %v573, 0
    %vm585 = vcmask 1041408
    %v587 = vsel %vm585, %v47, 0
    %589 = vmatprep.subr.mxu0 0.0
    %590 = vmatpush1.msra.mxu0 0.0
    %591 = vmatprep.subr.mxu0 0.0
    %592 = vmatpush1.msra.mxu0 0.0
    %593 = vmatprep.subr.mxu0 0.0
    %594 = vmatpush1.msra.mxu0 0.0
    %595 = vmatprep.subr.mxu0 0.0
    %596 = vmatpush1.msra.mxu0 0.0
    %597 = vmatprep.subr.mxu0 0.0
    %598 = vmatpush1.msra.mxu0 0.0
    %599 = vmatprep.subr.mxu0 0.0
    %600 = vmatpush1.msra.mxu0 0.0
    %601 = vmatprep.subr.mxu0 0.0
    %602 = vmatpush1.msra.mxu0 0.0
    %603 = vmatprep.subr.mxu0 0.0
    %604 = vmatpush1.msra.mxu0 0.0
    %605 = vmatprep.subr.mxu0 0.0
    %606 = vmatpush1.msra.mxu0 0.0
    %607 = vmatprep.subr.mxu0 0.0
    %608 = vmatpush1.msra.mxu0 0.0
    %609 = vmatprep.subr.mxu0 0.0
    %610 = vmatpush1.msra.mxu0 0.0
    %611 = vmatprep.subr.mxu0 0.0
    %612 = vmatpush1.msra.mxu0 0.0
    %613 = vmatprep.subr.mxu0 0.0
    %614 = vmatpush1.msra.mxu0 0.0
    %615 = vmatprep.subr.mxu0 0.0
    %616 = vmatpush1.msra.mxu0 %v587
    %617 = vmatprep.subr.mxu0 0.0
    %618 = vmatpush1.msra.mxu0 %v46
    %619 = vmatprep.subr.mxu0 0.0
    %620 = vmatpush1.msra.mxu0 %v45
    %621 = vmatprep.subr.mxu0 0.0
    %622 = vmatpush2.msra.mxu0 0.0
    %623 = vmatprep.subr.mxu0 0.0
    %624 = vmatpush2.msra.mxu0 0.0
    %625 = vmatprep.subr.mxu0 0.0
    %626 = vmatpush2.msra.mxu0 0.0
    %627 = vmatprep.subr.mxu0 0.0
    %628 = vmatpush2.msra.mxu0 0.0
    %629 = vmatprep.subr.mxu0 0.0
    %630 = vmatpush2.msra.mxu0 0.0
    %631 = vmatprep.subr.mxu0 0.0
    %632 = vmatpush2.msra.mxu0 0.0
    %633 = vmatprep.subr.mxu0 0.0
    %634 = vmatpush2.msra.mxu0 0.0
    %635 = vmatprep.subr.mxu0 0.0
    %636 = vmatpush2.msra.mxu0 0.0
    %637 = vmatprep.subr.mxu0 0.0
    %638 = vmatpush2.msra.mxu0 0.0
    %639 = vmatprep.subr.mxu0 0.0
    %640 = vmatpush2.msra.mxu0 0.0
    %641 = vmatprep.subr.mxu0 0.0
    %642 = vmatpush2.msra.mxu0 0.0
    %643 = vmatprep.subr.mxu0 0.0
    %644 = vmatpush2.msra.mxu0 0.0
    %645 = vmatprep.subr.mxu0 0.0
    %646 = vmatpush2.msra.mxu0 0.0
    %647 = vmatprep.subr.mxu0 0.0
    %648 = vmatpush2.msra.mxu0 0.0
    %649 = vmatprep.subr.mxu0 0.0
    %650 = vmatpush2.msra.mxu0 0.0
    %651 = vmatprep.subr.mxu0 0.0
    %652 = vmatpush2.msra.mxu0 0.0
    %653 = vmatprep.mubr.f32.mxu0 0.0
    %654 = vmatmul.mubr.f32.gmra.mxu0 %v580
    %v655 = vpop.f32.mrf.mxu0
    %v656 = vadd.f32 0.0, %v655
    %v657 = vpop.f32.mrf.mxu0
    %658 = vmatprep.mubr.f32.mxu0 0.0
    %659 = vmatmul.mubr.f32.gmra.mxu0 %v583
    %v660 = vpop.f32.mrf.mxu0
    %v661 = vadd.f32 0.0, %v660
    %v662 = vpop.f32.mrf.mxu0
    %663 = vdwg.mxu0
    %v665 = vsel %vm69, %v570, 0
    %v668 = vsel %vm69, %v571, 0
    %670 = vmatprep.subr.mxu0 0.0
    %671 = vmatpush1.msra.mxu0 0.0
    %672 = vmatprep.subr.mxu0 0.0
    %673 = vmatpush1.msra.mxu0 0.0
    %674 = vmatprep.subr.mxu0 0.0
    %675 = vmatpush1.msra.mxu0 0.0
    %676 = vmatprep.subr.mxu0 0.0
    %677 = vmatpush1.msra.mxu0 0.0
    %678 = vmatprep.subr.mxu0 0.0
    %679 = vmatpush1.msra.mxu0 0.0
    %680 = vmatprep.subr.mxu0 0.0
    %681 = vmatpush1.msra.mxu0 0.0
    %682 = vmatprep.subr.mxu0 0.0
    %683 = vmatpush1.msra.mxu0 0.0
    %684 = vmatprep.subr.mxu0 0.0
    %685 = vmatpush1.msra.mxu0 0.0
    %686 = vmatprep.subr.mxu0 0.0
    %687 = vmatpush1.msra.mxu0 0.0
    %688 = vmatprep.subr.mxu0 0.0
    %689 = vmatpush1.msra.mxu0 0.0
    %690 = vmatprep.subr.mxu0 0.0
    %691 = vmatpush1.msra.mxu0 0.0
    %692 = vmatprep.subr.mxu0 0.0
    %693 = vmatpush1.msra.mxu0 0.0
    %694 = vmatprep.subr.mxu0 0.0
    %695 = vmatpush1.msra.mxu0 0.0
    %696 = vmatprep.subr.mxu0 0.0
    %697 = vmatpush1.msra.mxu0 %v587
    %698 = vmatprep.subr.mxu0 0.0
    %699 = vmatpush1.msra.mxu0 %v46
    %700 = vmatprep.subr.mxu0 0.0
    %701 = vmatpush1.msra.mxu0 %v45
    %702 = vmatprep.subr.mxu0 0.0
    %703 = vmatpush2.msra.mxu0 0.0
    %704 = vmatprep.subr.mxu0 0.0
    %705 = vmatpush2.msra.mxu0 0.0
    %706 = vmatprep.subr.mxu0 0.0
    %707 = vmatpush2.msra.mxu0 0.0
    %708 = vmatprep.subr.mxu0 0.0
    %709 = vmatpush2.msra.mxu0 0.0
    %710 = vmatprep.subr.mxu0 0.0
    %711 = vmatpush2.msra.mxu0 0.0
    %712 = vmatprep.subr.mxu0 0.0
    %713 = vmatpush2.msra.mxu0 0.0
    %714 = vmatprep.subr.mxu0 0.0
    %715 = vmatpush2.msra.mxu0 0.0
    %716 = vmatprep.subr.mxu0 0.0
    %717 = vmatpush2.msra.mxu0 0.0
    %718 = vmatprep.subr.mxu0 0.0
    %719 = vmatpush2.msra.mxu0 0.0
    %720 = vmatprep.subr.mxu0 0.0
    %721 = vmatpush2.msra.mxu0 0.0
    %722 = vmatprep.subr.mxu0 0.0
    %723 = vmatpush2.msra.mxu0 0.0
    %724 = vmatprep.subr.mxu0 0.0
    %725 = vmatpush2.msra.mxu0 0.0
    %726 = vmatprep.subr.mxu0 0.0
    %727 = vmatpush2.msra.mxu0 0.0
    %728 = vmatprep.subr.mxu0 0.0
    %729 = vmatpush2.msra.mxu0 0.0
    %730 = vmatprep.subr.mxu0 0.0
    %731 = vmatpush2.msra.mxu0 0.0
    %732 = vmatprep.subr.mxu0 0.0
    %733 = vmatpush2.msra.mxu0 0.0
    %734 = vmatprep.mubr.f32.mxu0 0.0
    %735 = vmatmul.mubr.f32.gmra.mxu0 %v665
    %v736 = vpop.f32.mrf.mxu0
    %v737 = vadd.f32 %v656, %v736
    %v738 = vpop.f32.mrf.mxu0
    %739 = vmatprep.mubr.f32.mxu0 0.0
    %740 = vmatmul.mubr.f32.gmra.mxu0 %v668
    %v741 = vpop.f32.mrf.mxu0
    %v742 = vadd.f32 %v661, %v741
    %v743 = vpop.f32.mrf.mxu0
    %744 = vdwg.mxu0
    %v746 = vsel %vm69, %v577, 0
    %v749 = vsel %vm69, %v578, 0
    %751 = vmatprep.subr.mxu0 0.0
    %752 = vmatpush1.msra.mxu0 0.0
    %753 = vmatprep.subr.mxu0 0.0
    %754 = vmatpush1.msra.mxu0 0.0
    %755 = vmatprep.subr.mxu0 0.0
    %756 = vmatpush1.msra.mxu0 0.0
    %757 = vmatprep.subr.mxu0 0.0
    %758 = vmatpush1.msra.mxu0 0.0
    %759 = vmatprep.subr.mxu0 0.0
    %760 = vmatpush1.msra.mxu0 0.0
    %761 = vmatprep.subr.mxu0 0.0
    %762 = vmatpush1.msra.mxu0 0.0
    %763 = vmatprep.subr.mxu0 0.0
    %764 = vmatpush1.msra.mxu0 0.0
    %765 = vmatprep.subr.mxu0 0.0
    %766 = vmatpush1.msra.mxu0 0.0
    %767 = vmatprep.subr.mxu0 0.0
    %768 = vmatpush1.msra.mxu0 0.0
    %769 = vmatprep.subr.mxu0 0.0
    %770 = vmatpush1.msra.mxu0 0.0
    %771 = vmatprep.subr.mxu0 0.0
    %772 = vmatpush1.msra.mxu0 0.0
    %773 = vmatprep.subr.mxu0 0.0
    %774 = vmatpush1.msra.mxu0 0.0
    %775 = vmatprep.subr.mxu0 0.0
    %776 = vmatpush1.msra.mxu0 0.0
    %777 = vmatprep.subr.mxu0 0.0
    %778 = vmatpush1.msra.mxu0 %v587
    %779 = vmatprep.subr.mxu0 0.0
    %780 = vmatpush1.msra.mxu0 %v46
    %781 = vmatprep.subr.mxu0 0.0
    %782 = vmatpush1.msra.mxu0 %v45
    %783 = vmatprep.subr.mxu0 0.0
    %784 = vmatpush2.msra.mxu0 0.0
    %785 = vmatprep.subr.mxu0 0.0
    %786 = vmatpush2.msra.mxu0 0.0
    %787 = vmatprep.subr.mxu0 0.0
    %788 = vmatpush2.msra.mxu0 0.0
    %789 = vmatprep.subr.mxu0 0.0
    %790 = vmatpush2.msra.mxu0 0.0
    %791 = vmatprep.subr.mxu0 0.0
    %792 = vmatpush2.msra.mxu0 0.0
    %793 = vmatprep.subr.mxu0 0.0
    %794 = vmatpush2.msra.mxu0 0.0
    %795 = vmatprep.subr.mxu0 0.0
    %796 = vmatpush2.msra.mxu0 0.0
    %797 = vmatprep.subr.mxu0 0.0
    %798 = vmatpush2.msra.mxu0 0.0
    %799 = vmatprep.subr.mxu0 0.0
    %800 = vmatpush2.msra.mxu0 0.0
    %801 = vmatprep.subr.mxu0 0.0
    %802 = vmatpush2.msra.mxu0 0.0
    %803 = vmatprep.subr.mxu0 0.0
    %804 = vmatpush2.msra.mxu0 0.0
    %805 = vmatprep.subr.mxu0 0.0
    %806 = vmatpush2.msra.mxu0 0.0
    %807 = vmatprep.subr.mxu0 0.0
    %808 = vmatpush2.msra.mxu0 0.0
    %809 = vmatprep.subr.mxu0 0.0
    %810 = vmatpush2.msra.mxu0 0.0
    %811 = vmatprep.subr.mxu0 0.0
    %812 = vmatpush2.msra.mxu0 0.0
    %813 = vmatprep.subr.mxu0 0.0
    %814 = vmatpush2.msra.mxu0 0.0
    %815 = vmatprep.mubr.f32.mxu0 0.0
    %816 = vmatmul.mubr.f32.gmra.mxu0 %v746
    %v817 = vpop.f32.mrf.mxu0
    %v818 = vadd.f32 0.0, %v817
    %v819 = vpop.f32.mrf.mxu0
    %820 = vmatprep.mubr.f32.mxu0 0.0
    %821 = vmatmul.mubr.f32.gmra.mxu0 %v749
    %v822 = vpop.f32.mrf.mxu0
    %v823 = vadd.f32 0.0, %v822
    %v824 = vpop.f32.mrf.mxu0
    %825 = vdwg.mxu0
    %v827 = vsel %vm69, %v575, 0
    %v830 = vsel %vm69, %v576, 0
    %832 = vmatprep.subr.mxu0 0.0
    %833 = vmatpush1.msra.mxu0 0.0
    %834 = vmatprep.subr.mxu0 0.0
    %835 = vmatpush1.msra.mxu0 0.0
    %836 = vmatprep.subr.mxu0 0.0
    %837 = vmatpush1.msra.mxu0 0.0
    %838 = vmatprep.subr.mxu0 0.0
    %839 = vmatpush1.msra.mxu0 0.0
    %840 = vmatprep.subr.mxu0 0.0
    %841 = vmatpush1.msra.mxu0 0.0
    %842 = vmatprep.subr.mxu0 0.0
    %843 = vmatpush1.msra.mxu0 0.0
    %844 = vmatprep.subr.mxu0 0.0
    %845 = vmatpush1.msra.mxu0 0.0
    %846 = vmatprep.subr.mxu0 0.0
    %847 = vmatpush1.msra.mxu0 0.0
    %848 = vmatprep.subr.mxu0 0.0
    %849 = vmatpush1.msra.mxu0 0.0
    %850 = vmatprep.subr.mxu0 0.0
    %851 = vmatpush1.msra.mxu0 0.0
    %852 = vmatprep.subr.mxu0 0.0
    %853 = vmatpush1.msra.mxu0 0.0
    %854 = vmatprep.subr.mxu0 0.0
    %855 = vmatpush1.msra.mxu0 0.0
    %856 = vmatprep.subr.mxu0 0.0
    %857 = vmatpush1.msra.mxu0 0.0
    %858 = vmatprep.subr.mxu0 0.0
    %859 = vmatpush1.msra.mxu0 %v587
    %860 = vmatprep.subr.mxu0 0.0
    %861 = vmatpush1.msra.mxu0 %v46
    %862 = vmatprep.subr.mxu0 0.0
    %863 = vmatpush1.msra.mxu0 %v45
    %864 = vmatprep.subr.mxu0 0.0
    %865 = vmatpush2.msra.mxu0 0.0
    %866 = vmatprep.subr.mxu0 0.0
    %867 = vmatpush2.msra.mxu0 0.0
    %868 = vmatprep.subr.mxu0 0.0
    %869 = vmatpush2.msra.mxu0 0.0
    %870 = vmatprep.subr.mxu0 0.0
    %871 = vmatpush2.msra.mxu0 0.0
    %872 = vmatprep.subr.mxu0 0.0
    %873 = vmatpush2.msra.mxu0 0.0
    %874 = vmatprep.subr.mxu0 0.0
    %875 = vmatpush2.msra.mxu0 0.0
    %876 = vmatprep.subr.mxu0 0.0
    %877 = vmatpush2.msra.mxu0 0.0
    %878 = vmatprep.subr.mxu0 0.0
    %879 = vmatpush2.msra.mxu0 0.0
    %880 = vmatprep.subr.mxu0 0.0
    %881 = vmatpush2.msra.mxu0 0.0
    %882 = vmatprep.subr.mxu0 0.0
    %883 = vmatpush2.msra.mxu0 0.0
    %884 = vmatprep.subr.mxu0 0.0
    %885 = vmatpush2.msra.mxu0 0.0
    %886 = vmatprep.subr.mxu0 0.0
    %887 = vmatpush2.msra.mxu0 0.0
    %888 = vmatprep.subr.mxu0 0.0
    %889 = vmatpush2.msra.mxu0 0.0
    %890 = vmatprep.subr.mxu0 0.0
    %891 = vmatpush2.msra.mxu0 0.0
    %892 = vmatprep.subr.mxu0 0.0
    %893 = vmatpush2.msra.mxu0 0.0
    %894 = vmatprep.subr.mxu0 0.0
    %895 = vmatpush2.msra.mxu0 0.0
    %896 = vmatprep.mubr.f32.mxu0 0.0
    %897 = vmatmul.mubr.f32.gmra.mxu0 %v827
    %v898 = vpop.f32.mrf.mxu0
    %v899 = vadd.f32 %v818, %v898
    %v900 = vpop.f32.mrf.mxu0
    %901 = vmatprep.mubr.f32.mxu0 0.0
    %902 = vmatmul.mubr.f32.gmra.mxu0 %v830
    %v903 = vpop.f32.mrf.mxu0
    %v904 = vadd.f32 %v823, %v903
    %v905 = vpop.f32.mrf.mxu0
    %906 = vdwg.mxu0
    %v907 = vlog2.pop %v737
    %v908 = vmul.f32 %v907, 0.6931472
    %v909 = vlog2.pop %v742
    %v910 = vmul.f32 %v909, 0.6931472
    %v911 = vsub.f32 %v908, %v899
    %v912 = vsub.f32 %v910, %v904
    %v913 = vld [vmem:[#allocation2] sm:$0x1]
    %v914 = vmul.f32 %v911, %v39
    %v915 = vmul.f32 %v912, %v40
    %v916 = vsel %vm56, 1, 0
    %v917 = vsel %vm57, 1, 0
    %vm918 = vcmp.eq.s32.totalorder %v916, 1
    %vm919 = vcmp.eq.s32.totalorder %v917, 1
    %v920 = vsel %vm918, %v914, 0.0
    %v921 = vsel %vm919, %v915, 0.0
    %v922 = vsel %vm295, %v920, 0.0
    %v923 = vsel %vm295, %v921, 0.0
    %v924 = vadd.f32 %v922, %v923
    %v925 = vrot.slane %v924, 4
    %v926 = vadd.f32 %v924, %v925
    %v927 = vrot.slane %v926, 2
    %v928 = vadd.f32 %v926, %v927
    %v929 = vrot.slane %v928, 1
    %v930 = vadd.f32 %v928, %v929
    %v931 = vadd.f32 %v913, %v930
    %vm932 = vcmask 24576
    %933 = vst.msk [vmem:[#allocation2] sm:$0x1] %vm932, %v931
    %v934 = vld [vmem:[#allocation3] sm:$0x1]
    %v935 = vsel %vm918, %v39, 0.0
    %v936 = vsel %vm919, %v40, 0.0
    %v937 = vsel %vm295, %v935, 0.0
    %v938 = vsel %vm295, %v936, 0.0
    %v939 = vadd.f32 %v937, %v938
    %v940 = vrot.slane %v939, 4
    %v941 = vadd.f32 %v939, %v940
    %v942 = vrot.slane %v941, 2
    %v943 = vadd.f32 %v941, %v942
    %v944 = vrot.slane %v943, 1
    %v945 = vadd.f32 %v943, %v944
    %v946 = vadd.f32 %v934, %v945
    %947 = vst.msk [vmem:[#allocation3] sm:$0x1] %vm932, %v946
    %v948 = vld [vmem:[%s1] sm:$0xff]
    %v949 = vld [vmem:[%s1 + $0x8] sm:$0xff]
    %952 = vrot.lane.b32.xlu0 %v37, 124
    %v953 = vpop.permute.xlu0 %952
    %954 = vrot.lane.b32.xlu0 %v38, 124
    %v955 = vpop.permute.xlu0 %954
    %v958 = vsub.f32 %v948, %v953
    %v959 = vsub.f32 %v949, %v955
    %v960 = vld [vmem:[#allocation4] sm:$0x1]
    %v961 = vmul.f32 %v958, %v958
    %v962 = vmul.f32 %v959, %v959
    %965 = vrot.lane.b32.xlu0 %v39, 124
    %v966 = vpop.permute.xlu0 %965
    %967 = vrot.lane.b32.xlu0 %v40, 124
    %v968 = vpop.permute.xlu0 %967
    %v971 = vmul.f32 %v961, %v966
    %v972 = vmul.f32 %v962, %v968
    %v973 = vsel %vm918, %v971, 0.0
    %v974 = vsel %vm919, %v972, 0.0
    %v975 = vsel %vm295, %v973, 0.0
    %v976 = vsel %vm295, %v974, 0.0
    %v977 = vadd.f32 %v975, %v976
    %v978 = vrot.slane %v977, 4
    %v979 = vadd.f32 %v977, %v978
    %v980 = vrot.slane %v979, 2
    %v981 = vadd.f32 %v979, %v980
    %v982 = vrot.slane %v981, 1
    %v983 = vadd.f32 %v981, %v982
    %v984 = vadd.f32 %v960, %v983
    %985 = vst.msk [vmem:[#allocation4] sm:$0x1] %vm932, %v984
    %v986 = vld [vmem:[#allocation5] sm:$0x1]
    %vm987 = vcmask 64544
    %v988 = vsel %vm987, %v935, 0.0
    %v989 = vsel %vm987, %v936, 0.0
    %v990 = vadd.f32 %v988, %v989
    %v991 = vrot.slane %v990, 4
    %v992 = vadd.f32 %v990, %v991
    %v993 = vrot.slane %v992, 2
    %v994 = vadd.f32 %v992, %v993
    %v995 = vrot.slane %v994, 1
    %v996 = vadd.f32 %v994, %v995
    %v999 = vunpack.c.l.s4 1966171168
    %v1000 = vunpack.c.0.s8 %v999
    %v1001 = vlaneseq
    %v1002 = vshrl.u32 %v1001, 7
    %v1003 = vsub.s32 %v1000, %v1002
    %v1004 = vrot.slane %v996, %v1003
    %v1006 = vunpack.c.l.s4 1966171168
    %v1007 = vunpack.c.0.s8 %v1006
    %v1008 = vlaneseq
    %v1009 = vshrl.u32 %v1008, 7
    %v1010 = vsub.s32 %v1007, %v1009
    %v1011 = vrot.slane %v1004, %v1010
    %1012 = vrot.lane.b32.xlu0 %v1011, 124
    %v1013 = vpop.permute.xlu0 %1012
    %v1015 = vadd.f32 %v986, %v1013
    %1016 = vst.msk [vmem:[#allocation5] sm:$0x1] %vm932, %v1015
    // Predicated region
    $region30: #{tpu_custom_call.1} parent=1 // pred_check
      %p1017 = pneg %p26
    $region31: #{tpu_custom_call.1} parent=1 // pred_check_branch
      %1019 = sbr.rel (%p1017) target = $region33
    $region32: #{tpu_custom_call.1} parent=1 // pred_region
      %v1020 = vld [vmem:[#allocation2] sm:$0x1]
      %v1021 = vld [vmem:[#allocation3] sm:$0x1]
      %v1022 = vadd.f32 %v1021, 1e-08
      %v1023 = vrcp.pop %v1022
      %v1024 = vmul.f32 %v1020, %v1023
      %v1025 = vsel %vm932, %v1024, 0.0
      %1026 = vadd.xlane.f32.xlu0 %v1025
      %v1027 = vpop.xlane.xlu0 %1026
      %v1028 = vrot.slane %v1027, 4
      %v1029 = vadd.f32 %v1027, %v1028
      %v1030 = vrot.slane %v1029, 2
      %v1031 = vadd.f32 %v1029, %v1030
      %v1032 = vrot.slane %v1031, 1
      %v1033 = vadd.f32 %v1031, %v1032
      %s1034 = vtos %v1033
      %v1035 = vrcp.pop 4.0
      %s1036 = vtos %v1035
      %s1037 = smul.f32 %s1034, %s1036
      %v1038 = vld [vmem:[#allocation4] sm:$0x1]
      %v1039 = vsel %vm932, %v1038, 0.0
      %1040 = vadd.xlane.f32.xlu0 %v1039
      %v1041 = vpop.xlane.xlu0 %1040
      %v1042 = vrot.slane %v1041, 4
      %v1043 = vadd.f32 %v1041, %v1042
      %v1044 = vrot.slane %v1043, 2
      %v1045 = vadd.f32 %v1043, %v1044
      %v1046 = vrot.slane %v1045, 1
      %v1047 = vadd.f32 %v1045, %v1046
      %s1048 = vtos %v1047
      %v1049 = vld [vmem:[#allocation5] sm:$0x1]
      %v1050 = vsel %vm932, %v1049, 0.0
      %1051 = vadd.xlane.f32.xlu0 %v1050
      %v1052 = vpop.xlane.xlu0 %1051
      %v1053 = vrot.slane %v1052, 4
      %v1054 = vadd.f32 %v1052, %v1053
      %v1055 = vrot.slane %v1054, 2
      %v1056 = vadd.f32 %v1054, %v1055
      %v1057 = vrot.slane %v1056, 1
      %v1058 = vadd.f32 %v1056, %v1057
      %s1059 = vtos %v1058
      %s1060 = sadd.f32 %s1059, 1e-08
      %v1061 = vstv %s1060
      %v1062 = vrcp.pop %v1061
      %s1063 = vtos %v1062
      %s1064 = smul.f32 %s1048, %s1063
      %s1065 = sadd.f32 %s1037, %s1064
      %s1066 = smul.f32 %s1065, 0.5
      %s1067 = scalar_lea.smem [#allocation6], 0
      %1068 = sst [smem:[%s1067]] %s1066
    $region33: #{tpu_custom_call.1} parent=1 // pred_fallthru
      _
    // Predicated region
    $region34: #{tpu_custom_call.1} parent=1 // pred_check
      _
    $region35: #{tpu_custom_call.1} parent=1 // pred_check_branch
      %1070 = sbr.rel (0) target = $region37
    $region36: #{tpu_custom_call.1} parent=1 // pred_region
      %s1072 = ssub.s32 16, 16
      %1073 = vsyncadd [#allocation7], %s1072
      %1076 = dma.smem_to_hbm [#allocation6], 16, %s6, [#allocation7]
    $region37: #{tpu_custom_call.1} parent=1 // pred_fallthru
      _
    // Predicated region
    $region38: #{tpu_custom_call.1} parent=1 // pred_check
      _
    $region39: #{tpu_custom_call.1} parent=1 // pred_check_branch
      %1078 = sbr.rel (0) target = $region41
    $region40: #{tpu_custom_call.1} parent=1 // pred_region
      _
    $region41: #{tpu_custom_call.1} parent=1 // pred_fallthru
      _
    // Predicated region
    $region42: #{tpu_custom_call.1} parent=1 // pred_check
      _
    $region43: #{tpu_custom_call.1} parent=1 // pred_check_branch
      %1080 = sbr.rel (0) target = $region45
    $region44: #{tpu_custom_call.1} parent=1 // pred_region
      %1081 = dma.done [#allocation7], 16
    $region45: #{tpu_custom_call.1} parent=1 // pred_fallthru
      _
    // Predicated region
    $region46: #{tpu_custom_call.1} parent=1 // pred_check
      _
    $region47: #{tpu_custom_call.1} parent=1 // pred_check_branch
      %1083 = sbr.rel (0) target = $region49
    $region48: #{tpu_custom_call.1} parent=1 // pred_region
      _
    $region49: #{tpu_custom_call.1} parent=1 // pred_fallthru
      _
    %1084 = sfence
    %1085 = vsyncpa [#allocation7], 1

</llo_original>
